<compile_context>
chip_gen: v7x
topology: tpu7x:2x2x1
jax: 0.10.0
libtpu: 0.0.40
codegen_flags: <defaults>
</compile_context>

<pallas_src>
import functools

import numpy as np
import jax
import jax.numpy as jnp
from jax.experimental import pallas as pl
from jax.experimental.pallas import tpu as pltpu

# ---------------- configuration (small, consistent with the module) ----------------
B, H, W, DIM = 2, 16, 16, 64          # input is NHWC: (B, H, W, C)
DIM_OUT = 2 * DIM                     # conv doubles the channel dim
KH = KW = 3
STRIDE = 2
LN_EPS = 1e-5                         # nn.LayerNorm default


# ---------------- fused conv(3x3, stride 2, pad 1, no bias) + LayerNorm kernel -----
def conv_ln_kernel(xp_ref, w_ref, g_ref, b_ref, o_ref, *, ho, wo, cin, cout):
    # xp_ref: (1, 4, ho+1, wo+1, cin) f32  -- parity-split zero-padded input
    #         plane t = 2*dh + dw holds x_pad[2*p + dh, 2*q + dw, :]
    # w_ref : (9, cin, cout) bf16          -- tap-major conv weights (HWIO order)
    # g_ref / b_ref : (1, cout) f32        -- LayerNorm affine params
    # o_ref : (1, ho*wo, cout) f32
    acc = jnp.zeros((ho * wo, cout), jnp.float32)
    for kh in range(KH):
        for kw in range(KW):
            t = (kh % 2) * 2 + (kw % 2)            # which parity plane
            sh, sw = kh // 2, kw // 2              # unit-stride shift inside it
            patch = xp_ref[0, t, pl.ds(sh, ho), pl.ds(sw, wo), :]   # (ho, wo, cin)
            lhs = patch.reshape(ho * wo, cin).astype(jnp.bfloat16)  # cast at MXU boundary
            acc = acc + jnp.dot(lhs, w_ref[kh * KW + kw],
                                preferred_element_type=jnp.float32)
    # LayerNorm over the channel dim (f32)
    mu = jnp.mean(acc, axis=-1, keepdims=True)
    xc = acc - mu
    var = jnp.mean(xc * xc, axis=-1, keepdims=True)
    o_ref[0] = xc * jax.lax.rsqrt(var + LN_EPS) * g_ref[...] + b_ref[...]


# ---------------- wrapper ----------------
def conv_downsampler(x, params):
    Bb, Hh, Ww, C = x.shape
    Cout = 2 * C
    Ho = (Hh - 1) // 2 + 1
    Wo = (Ww - 1) // 2 + 1
    Hp1, Wp1 = Ho + 1, Wo + 1

    # Zero-pad: conv padding=1 on top/left; pad bottom/right up to 2*(Ho+1)/2*(Wo+1)
    # so the parity reshape is exact (extra rows/cols are never read by any tap).
    pad_b = 2 * Hp1 - (Hh + 1)
    pad_r = 2 * Wp1 - (Ww + 1)
    xp = jnp.pad(x, ((0, 0), (1, pad_b), (1, pad_r), (0, 0)))
    # Space-to-depth parity split (pure layout plumbing, no data duplication).
    xp = xp.reshape(Bb, Hp1, 2, Wp1, 2, C)
    xp = jnp.transpose(xp, (0, 2, 4, 1, 3, 5)).reshape(Bb, 4, Hp1, Wp1, C)

    w_bf16 = params["w"].astype(jnp.bfloat16)       # weights only feed the MXU

    kernel = functools.partial(conv_ln_kernel, ho=Ho, wo=Wo, cin=C, cout=Cout)
    out = pl.pallas_call(
        kernel,
        out_shape=jax.ShapeDtypeStruct((Bb, Ho * Wo, Cout), jnp.float32),
        grid=(Bb,),
        in_specs=[
            pl.BlockSpec((1, 4, Hp1, Wp1, C), lambda b: (b, 0, 0, 0, 0)),
            pl.BlockSpec((KH * KW, C, Cout), lambda b: (0, 0, 0)),
            pl.BlockSpec((1, Cout), lambda b: (0, 0)),
            pl.BlockSpec((1, Cout), lambda b: (0, 0)),
        ],
        out_specs=pl.BlockSpec((1, Ho * Wo, Cout), lambda b: (b, 0, 0)),
        compiler_params=pltpu.CompilerParams(dimension_semantics=("parallel",)),
    )(xp, w_bf16, params["gamma"], params["beta"])
    return out.reshape(Bb, Ho, Wo, Cout)


# ---------------- pure-JAX reference (module semantics, f32) ----------------
def conv_downsampler_ref(x, params):
    _, _, _, C = x.shape
    w = params["w"].reshape(KH, KW, C, 2 * C)       # HWIO
    y = jax.lax.conv_general_dilated(
        x, w, window_strides=(STRIDE, STRIDE), padding=((1, 1), (1, 1)),
        dimension_numbers=("NHWC", "HWIO", "NHWC"),
        precision=jax.lax.Precision.HIGHEST)
    mu = jnp.mean(y, axis=-1, keepdims=True)
    yc = y - mu
    var = jnp.mean(yc * yc, axis=-1, keepdims=True)
    return yc * jax.lax.rsqrt(var + LN_EPS) * params["gamma"][0] + params["beta"][0]


# ---------------- deterministic parameter init ----------------
def init_params(key):
    k1, k2, k3 = jax.random.split(key, 3)
    fan_in = KH * KW * DIM
    w = jax.random.normal(k1, (KH * KW, DIM, DIM_OUT), jnp.float32) / np.sqrt(fan_in)
    # nn.LayerNorm initializes weight=1, bias=0; perturb slightly so the affine
    # path is actually exercised by the self-check.
    gamma = 1.0 + 0.1 * jax.random.normal(k2, (1, DIM_OUT), jnp.float32)
    beta = 0.1 * jax.random.normal(k3, (1, DIM_OUT), jnp.float32)
    return {"w": w, "gamma": gamma, "beta": beta}


if __name__ == "__main__":
    key = jax.random.PRNGKey(0)
    pkey, xkey = jax.random.split(key)
    params = init_params(pkey)
    x = jax.random.normal(xkey, (B, H, W, DIM), jnp.float32)

    out = jax.block_until_ready(conv_downsampler(x, params))
    ref = conv_downsampler_ref(x, params)

    assert out.shape == (B, H // 2, W // 2, DIM_OUT)
    # Tolerance accounts for bf16 MXU inputs (f32 accumulation) vs. the f32 reference.
    np.testing.assert_allclose(np.asarray(out), np.asarray(ref), rtol=2e-2, atol=2e-2)
    print("KERNEL_OK")
</pallas_src>

<mosaic_0001>
module attributes {stable_mosaic.version = 11 : i64} {
  func.func @conv_ln_kernel(%arg0: i32, %arg1: memref<1x4x9x9x64xf32, #tpu.memory_space<vmem>>, %arg2: memref<9x64x128xbf16, #tpu.memory_space<vmem>>, %arg3: memref<1x128xf32, #tpu.memory_space<vmem>>, %arg4: memref<1x128xf32, #tpu.memory_space<vmem>>, %arg5: memref<1x64x128xf32, #tpu.memory_space<vmem>>) attributes {dimension_semantics = [#tpu.dimension_semantics<parallel>], iteration_bounds = array<i64: 2>, scalar_prefetch = 0 : i64, scratch_operands = 0 : i64, tpu.core_type = #tpu.core_type<tc>, window_params = [{transform_indices = @transform_0, window_bounds = array<i64: 1, 4, 9, 9, 64>}, {pipeline_mode = #tpu.pipeline_mode<synchronous>, transform_indices = @transform_1, window_bounds = array<i64: 9, 64, 128>}, {pipeline_mode = #tpu.pipeline_mode<synchronous>, transform_indices = @transform_2, window_bounds = array<i64: 1, 128>}, {pipeline_mode = #tpu.pipeline_mode<synchronous>, transform_indices = @transform_3, window_bounds = array<i64: 1, 128>}, {transform_indices = @transform_4, window_bounds = array<i64: 1, 64, 128>}]} {
    %cst = arith.constant 0.000000e+00 : f32
    %0 = vector.broadcast %cst : f32 to vector<64x128xf32>
    %c0 = arith.constant 0 : index
    %c0_0 = arith.constant 0 : index
    %c0_1 = arith.constant 0 : index
    %c0_2 = arith.constant 0 : index
    %c0_3 = arith.constant 0 : index
    %1 = vector.load %arg1[%c0, %c0_0, %c0_1, %c0_2, %c0_3] : memref<1x4x9x9x64xf32, #tpu.memory_space<vmem>>, vector<1x1x8x8x64xf32>
    %2 = vector.shape_cast %1 : vector<1x1x8x8x64xf32> to vector<8x8x64xf32>
    %3 = vector.shape_cast %2 : vector<8x8x64xf32> to vector<64x64xf32>
    %4 = arith.truncf %3 : vector<64x64xf32> to vector<64x64xbf16>
    %c0_4 = arith.constant 0 : index
    %c0_5 = arith.constant 0 : index
    %c0_6 = arith.constant 0 : index
    %5 = vector.load %arg2[%c0_4, %c0_5, %c0_6] : memref<9x64x128xbf16, #tpu.memory_space<vmem>>, vector<1x64x128xbf16>
    %6 = vector.shape_cast %5 : vector<1x64x128xbf16> to vector<64x128xbf16>
    %cst_7 = arith.constant dense<0.000000e+00> : vector<64x128xf32>
    %7 = tpu.matmul %4, %6, %cst_7 {dimension_numbers = #tpu.dot_dimension_numbers<[1], [0], [0], [1], [0, 0, 1, 1], [], []>} : vector<64x64xbf16>, vector<64x128xbf16>, vector<64x128xf32> -> vector<64x128xf32>
    %8 = arith.addf %0, %7 : vector<64x128xf32>
    %c0_8 = arith.constant 0 : index
    %c1 = arith.constant 1 : index
    %c0_9 = arith.constant 0 : index
    %c0_10 = arith.constant 0 : index
    %c0_11 = arith.constant 0 : index
    %9 = vector.load %arg1[%c0_8, %c1, %c0_9, %c0_10, %c0_11] : memref<1x4x9x9x64xf32, #tpu.memory_space<vmem>>, vector<1x1x8x8x64xf32>
    %10 = vector.shape_cast %9 : vector<1x1x8x8x64xf32> to vector<8x8x64xf32>
    %11 = vector.shape_cast %10 : vector<8x8x64xf32> to vector<64x64xf32>
    %12 = arith.truncf %11 : vector<64x64xf32> to vector<64x64xbf16>
    %c1_12 = arith.constant 1 : index
    %c0_13 = arith.constant 0 : index
    %c0_14 = arith.constant 0 : index
    %13 = vector.load %arg2[%c1_12, %c0_13, %c0_14] : memref<9x64x128xbf16, #tpu.memory_space<vmem>>, vector<1x64x128xbf16>
    %14 = vector.shape_cast %13 : vector<1x64x128xbf16> to vector<64x128xbf16>
    %cst_15 = arith.constant dense<0.000000e+00> : vector<64x128xf32>
    %15 = tpu.matmul %12, %14, %cst_15 {dimension_numbers = #tpu.dot_dimension_numbers<[1], [0], [0], [1], [0, 0, 1, 1], [], []>} : vector<64x64xbf16>, vector<64x128xbf16>, vector<64x128xf32> -> vector<64x128xf32>
    %16 = arith.addf %8, %15 : vector<64x128xf32>
    %c0_16 = arith.constant 0 : index
    %c0_17 = arith.constant 0 : index
    %c0_18 = arith.constant 0 : index
    %c1_19 = arith.constant 1 : index
    %c0_20 = arith.constant 0 : index
    %17 = vector.load %arg1[%c0_16, %c0_17, %c0_18, %c1_19, %c0_20] : memref<1x4x9x9x64xf32, #tpu.memory_space<vmem>>, vector<1x1x8x8x64xf32>
    %18 = vector.shape_cast %17 : vector<1x1x8x8x64xf32> to vector<8x8x64xf32>
    %19 = vector.shape_cast %18 : vector<8x8x64xf32> to vector<64x64xf32>
    %20 = arith.truncf %19 : vector<64x64xf32> to vector<64x64xbf16>
    %c2 = arith.constant 2 : index
    %c0_21 = arith.constant 0 : index
    %c0_22 = arith.constant 0 : index
    %21 = vector.load %arg2[%c2, %c0_21, %c0_22] : memref<9x64x128xbf16, #tpu.memory_space<vmem>>, vector<1x64x128xbf16>
    %22 = vector.shape_cast %21 : vector<1x64x128xbf16> to vector<64x128xbf16>
    %cst_23 = arith.constant dense<0.000000e+00> : vector<64x128xf32>
    %23 = tpu.matmul %20, %22, %cst_23 {dimension_numbers = #tpu.dot_dimension_numbers<[1], [0], [0], [1], [0, 0, 1, 1], [], []>} : vector<64x64xbf16>, vector<64x128xbf16>, vector<64x128xf32> -> vector<64x128xf32>
    %24 = arith.addf %16, %23 : vector<64x128xf32>
    %c0_24 = arith.constant 0 : index
    %c2_25 = arith.constant 2 : index
    %c0_26 = arith.constant 0 : index
    %c0_27 = arith.constant 0 : index
    %c0_28 = arith.constant 0 : index
    %25 = vector.load %arg1[%c0_24, %c2_25, %c0_26, %c0_27, %c0_28] : memref<1x4x9x9x64xf32, #tpu.memory_space<vmem>>, vector<1x1x8x8x64xf32>
    %26 = vector.shape_cast %25 : vector<1x1x8x8x64xf32> to vector<8x8x64xf32>
    %27 = vector.shape_cast %26 : vector<8x8x64xf32> to vector<64x64xf32>
    %28 = arith.truncf %27 : vector<64x64xf32> to vector<64x64xbf16>
    %c3 = arith.constant 3 : index
    %c0_29 = arith.constant 0 : index
    %c0_30 = arith.constant 0 : index
    %29 = vector.load %arg2[%c3, %c0_29, %c0_30] : memref<9x64x128xbf16, #tpu.memory_space<vmem>>, vector<1x64x128xbf16>
    %30 = vector.shape_cast %29 : vector<1x64x128xbf16> to vector<64x128xbf16>
    %cst_31 = arith.constant dense<0.000000e+00> : vector<64x128xf32>
    %31 = tpu.matmul %28, %30, %cst_31 {dimension_numbers = #tpu.dot_dimension_numbers<[1], [0], [0], [1], [0, 0, 1, 1], [], []>} : vector<64x64xbf16>, vector<64x128xbf16>, vector<64x128xf32> -> vector<64x128xf32>
    %32 = arith.addf %24, %31 : vector<64x128xf32>
    %c0_32 = arith.constant 0 : index
    %c3_33 = arith.constant 3 : index
    %c0_34 = arith.constant 0 : index
    %c0_35 = arith.constant 0 : index
    %c0_36 = arith.constant 0 : index
    %33 = vector.load %arg1[%c0_32, %c3_33, %c0_34, %c0_35, %c0_36] : memref<1x4x9x9x64xf32, #tpu.memory_space<vmem>>, vector<1x1x8x8x64xf32>
    %34 = vector.shape_cast %33 : vector<1x1x8x8x64xf32> to vector<8x8x64xf32>
    %35 = vector.shape_cast %34 : vector<8x8x64xf32> to vector<64x64xf32>
    %36 = arith.truncf %35 : vector<64x64xf32> to vector<64x64xbf16>
    %c4 = arith.constant 4 : index
    %c0_37 = arith.constant 0 : index
    %c0_38 = arith.constant 0 : index
    %37 = vector.load %arg2[%c4, %c0_37, %c0_38] : memref<9x64x128xbf16, #tpu.memory_space<vmem>>, vector<1x64x128xbf16>
    %38 = vector.shape_cast %37 : vector<1x64x128xbf16> to vector<64x128xbf16>
    %cst_39 = arith.constant dense<0.000000e+00> : vector<64x128xf32>
    %39 = tpu.matmul %36, %38, %cst_39 {dimension_numbers = #tpu.dot_dimension_numbers<[1], [0], [0], [1], [0, 0, 1, 1], [], []>} : vector<64x64xbf16>, vector<64x128xbf16>, vector<64x128xf32> -> vector<64x128xf32>
    %40 = arith.addf %32, %39 : vector<64x128xf32>
    %c0_40 = arith.constant 0 : index
    %c2_41 = arith.constant 2 : index
    %c0_42 = arith.constant 0 : index
    %c1_43 = arith.constant 1 : index
    %c0_44 = arith.constant 0 : index
    %41 = vector.load %arg1[%c0_40, %c2_41, %c0_42, %c1_43, %c0_44] : memref<1x4x9x9x64xf32, #tpu.memory_space<vmem>>, vector<1x1x8x8x64xf32>
    %42 = vector.shape_cast %41 : vector<1x1x8x8x64xf32> to vector<8x8x64xf32>
    %43 = vector.shape_cast %42 : vector<8x8x64xf32> to vector<64x64xf32>
    %44 = arith.truncf %43 : vector<64x64xf32> to vector<64x64xbf16>
    %c5 = arith.constant 5 : index
    %c0_45 = arith.constant 0 : index
    %c0_46 = arith.constant 0 : index
    %45 = vector.load %arg2[%c5, %c0_45, %c0_46] : memref<9x64x128xbf16, #tpu.memory_space<vmem>>, vector<1x64x128xbf16>
    %46 = vector.shape_cast %45 : vector<1x64x128xbf16> to vector<64x128xbf16>
    %cst_47 = arith.constant dense<0.000000e+00> : vector<64x128xf32>
    %47 = tpu.matmul %44, %46, %cst_47 {dimension_numbers = #tpu.dot_dimension_numbers<[1], [0], [0], [1], [0, 0, 1, 1], [], []>} : vector<64x64xbf16>, vector<64x128xbf16>, vector<64x128xf32> -> vector<64x128xf32>
    %48 = arith.addf %40, %47 : vector<64x128xf32>
    %c0_48 = arith.constant 0 : index
    %c0_49 = arith.constant 0 : index
    %c1_50 = arith.constant 1 : index
    %c0_51 = arith.constant 0 : index
    %c0_52 = arith.constant 0 : index
    %49 = vector.load %arg1[%c0_48, %c0_49, %c1_50, %c0_51, %c0_52] : memref<1x4x9x9x64xf32, #tpu.memory_space<vmem>>, vector<1x1x8x8x64xf32>
    %50 = vector.shape_cast %49 : vector<1x1x8x8x64xf32> to vector<8x8x64xf32>
    %51 = vector.shape_cast %50 : vector<8x8x64xf32> to vector<64x64xf32>
    %52 = arith.truncf %51 : vector<64x64xf32> to vector<64x64xbf16>
    %c6 = arith.constant 6 : index
    %c0_53 = arith.constant 0 : index
    %c0_54 = arith.constant 0 : index
    %53 = vector.load %arg2[%c6, %c0_53, %c0_54] : memref<9x64x128xbf16, #tpu.memory_space<vmem>>, vector<1x64x128xbf16>
    %54 = vector.shape_cast %53 : vector<1x64x128xbf16> to vector<64x128xbf16>
    %cst_55 = arith.constant dense<0.000000e+00> : vector<64x128xf32>
    %55 = tpu.matmul %52, %54, %cst_55 {dimension_numbers = #tpu.dot_dimension_numbers<[1], [0], [0], [1], [0, 0, 1, 1], [], []>} : vector<64x64xbf16>, vector<64x128xbf16>, vector<64x128xf32> -> vector<64x128xf32>
    %56 = arith.addf %48, %55 : vector<64x128xf32>
    %c0_56 = arith.constant 0 : index
    %c1_57 = arith.constant 1 : index
    %c1_58 = arith.constant 1 : index
    %c0_59 = arith.constant 0 : index
    %c0_60 = arith.constant 0 : index
    %57 = vector.load %arg1[%c0_56, %c1_57, %c1_58, %c0_59, %c0_60] : memref<1x4x9x9x64xf32, #tpu.memory_space<vmem>>, vector<1x1x8x8x64xf32>
    %58 = vector.shape_cast %57 : vector<1x1x8x8x64xf32> to vector<8x8x64xf32>
    %59 = vector.shape_cast %58 : vector<8x8x64xf32> to vector<64x64xf32>
    %60 = arith.truncf %59 : vector<64x64xf32> to vector<64x64xbf16>
    %c7 = arith.constant 7 : index
    %c0_61 = arith.constant 0 : index
    %c0_62 = arith.constant 0 : index
    %61 = vector.load %arg2[%c7, %c0_61, %c0_62] : memref<9x64x128xbf16, #tpu.memory_space<vmem>>, vector<1x64x128xbf16>
    %62 = vector.shape_cast %61 : vector<1x64x128xbf16> to vector<64x128xbf16>
    %cst_63 = arith.constant dense<0.000000e+00> : vector<64x128xf32>
    %63 = tpu.matmul %60, %62, %cst_63 {dimension_numbers = #tpu.dot_dimension_numbers<[1], [0], [0], [1], [0, 0, 1, 1], [], []>} : vector<64x64xbf16>, vector<64x128xbf16>, vector<64x128xf32> -> vector<64x128xf32>
    %64 = arith.addf %56, %63 : vector<64x128xf32>
    %c0_64 = arith.constant 0 : index
    %c0_65 = arith.constant 0 : index
    %c1_66 = arith.constant 1 : index
    %c1_67 = arith.constant 1 : index
    %c0_68 = arith.constant 0 : index
    %65 = vector.load %arg1[%c0_64, %c0_65, %c1_66, %c1_67, %c0_68] : memref<1x4x9x9x64xf32, #tpu.memory_space<vmem>>, vector<1x1x8x8x64xf32>
    %66 = vector.shape_cast %65 : vector<1x1x8x8x64xf32> to vector<8x8x64xf32>
    %67 = vector.shape_cast %66 : vector<8x8x64xf32> to vector<64x64xf32>
    %68 = arith.truncf %67 : vector<64x64xf32> to vector<64x64xbf16>
    %c8 = arith.constant 8 : index
    %c0_69 = arith.constant 0 : index
    %c0_70 = arith.constant 0 : index
    %69 = vector.load %arg2[%c8, %c0_69, %c0_70] : memref<9x64x128xbf16, #tpu.memory_space<vmem>>, vector<1x64x128xbf16>
    %70 = vector.shape_cast %69 : vector<1x64x128xbf16> to vector<64x128xbf16>
    %cst_71 = arith.constant dense<0.000000e+00> : vector<64x128xf32>
    %71 = tpu.matmul %68, %70, %cst_71 {dimension_numbers = #tpu.dot_dimension_numbers<[1], [0], [0], [1], [0, 0, 1, 1], [], []>} : vector<64x64xbf16>, vector<64x128xbf16>, vector<64x128xf32> -> vector<64x128xf32>
    %72 = arith.addf %64, %71 : vector<64x128xf32>
    %cst_72 = arith.constant dense<0.000000e+00> : vector<64xf32>
    %73 = vector.multi_reduction <add>, %72, %cst_72 [1] : vector<64x128xf32> to vector<64xf32>
    %74 = vector.shape_cast %73 : vector<64xf32> to vector<64x1xf32>
    %cst_73 = arith.constant 1.280000e+02 : f32
    %75 = vector.broadcast %cst_73 : f32 to vector<64x1xf32>
    %76 = arith.divf %74, %75 : vector<64x1xf32>
    %77 = vector.broadcast %76 : vector<64x1xf32> to vector<64x128xf32>
    %78 = arith.subf %72, %77 : vector<64x128xf32>
    %79 = arith.mulf %78, %78 : vector<64x128xf32>
    %cst_74 = arith.constant dense<0.000000e+00> : vector<64xf32>
    %80 = vector.multi_reduction <add>, %79, %cst_74 [1] : vector<64x128xf32> to vector<64xf32>
    %81 = vector.shape_cast %80 : vector<64xf32> to vector<64x1xf32>
    %cst_75 = arith.constant 1.280000e+02 : f32
    %82 = vector.broadcast %cst_75 : f32 to vector<64x1xf32>
    %83 = arith.divf %81, %82 : vector<64x1xf32>
    %cst_76 = arith.constant 9.99999974E-6 : f32
    %84 = vector.broadcast %cst_76 : f32 to vector<64x1xf32>
    %85 = arith.addf %83, %84 : vector<64x1xf32>
    %86 = math.rsqrt %85 : vector<64x1xf32>
    %87 = vector.broadcast %86 : vector<64x1xf32> to vector<64x128xf32>
    %88 = arith.mulf %78, %87 : vector<64x128xf32>
    %c0_77 = arith.constant 0 : index
    %c0_78 = arith.constant 0 : index
    %89 = vector.load %arg3[%c0_77, %c0_78] : memref<1x128xf32, #tpu.memory_space<vmem>>, vector<1x128xf32>
    %90 = vector.broadcast %89 : vector<1x128xf32> to vector<64x128xf32>
    %91 = arith.mulf %88, %90 : vector<64x128xf32>
    %c0_79 = arith.constant 0 : index
    %c0_80 = arith.constant 0 : index
    %92 = vector.load %arg4[%c0_79, %c0_80] : memref<1x128xf32, #tpu.memory_space<vmem>>, vector<1x128xf32>
    %93 = vector.broadcast %92 : vector<1x128xf32> to vector<64x128xf32>
    %94 = arith.addf %91, %93 : vector<64x128xf32>
    %c0_81 = arith.constant 0 : index
    %c0_82 = arith.constant 0 : index
    %c0_83 = arith.constant 0 : index
    %95 = vector.load %arg5[%c0_81, %c0_82, %c0_83] : memref<1x64x128xf32, #tpu.memory_space<vmem>>, vector<1x64x128xf32>
    %96 = vector.shape_cast %95 : vector<1x64x128xf32> to vector<64x128xf32>
    %97 = vector.shape_cast %94 : vector<64x128xf32> to vector<1x64x128xf32>
    tpu.vector_store %arg5[%c0_81, %c0_82, %c0_83], %97 {strides = array<i32>} : memref<1x64x128xf32, #tpu.memory_space<vmem>>, vector<1x64x128xf32>,
    return
  }
  func.func @transform_0(%arg0: i32) -> (i32, i32, i32, i32, i32) {
    %c0_i32 = arith.constant 0 : i32
    %c0_i32_0 = arith.constant 0 : i32
    %c0_i32_1 = arith.constant 0 : i32
    %c0_i32_2 = arith.constant 0 : i32
    %c0_i32_3 = arith.constant 0 : i32
    return %arg0, %c0_i32, %c0_i32_0, %c0_i32_1, %c0_i32_2 : i32, i32, i32, i32, i32
  }
  func.func @transform_1(%arg0: i32) -> (i32, i32, i32) {
    %c0_i32 = arith.constant 0 : i32
    %c0_i32_0 = arith.constant 0 : i32
    %c0_i32_1 = arith.constant 0 : i32
    %c0_i32_2 = arith.constant 0 : i32
    return %c0_i32, %c0_i32_0, %c0_i32_1 : i32, i32, i32
  }
  func.func @transform_2(%arg0: i32) -> (i32, i32) {
    %c0_i32 = arith.constant 0 : i32
    %c0_i32_0 = arith.constant 0 : i32
    %c0_i32_1 = arith.constant 0 : i32
    return %c0_i32, %c0_i32_0 : i32, i32
  }
  func.func @transform_3(%arg0: i32) -> (i32, i32) {
    %c0_i32 = arith.constant 0 : i32
    %c0_i32_0 = arith.constant 0 : i32
    %c0_i32_1 = arith.constant 0 : i32
    return %c0_i32, %c0_i32_0 : i32, i32
  }
  func.func @transform_4(%arg0: i32) -> (i32, i32, i32) {
    %c0_i32 = arith.constant 0 : i32
    %c0_i32_0 = arith.constant 0 : i32
    %c0_i32_1 = arith.constant 0 : i32
    return %arg0, %c0_i32, %c0_i32_0 : i32, i32, i32
  }
}

</mosaic_0001>

<llo_original>
// kernel: tpu_custom_call.1
$region0: #{tpu_custom_call.1}
  #allocation0 [shape = 'u32[]', space=smem, size = 0x4, offset = 0x4, fixed_abs, tag = 'smem constant byte address 0x4 - core index']
  #allocation1 [shape = 'u32[144,128]{1,0:T(1,128)}', space=vmem, size = 0x12000, scoped, tag = 'internal scratch']
  %s0 = inlined_call_operand.vmem [shape: f32[2,4,9,9,64], index: 0, kind: input, shape index: {}]
  %s1 = inlined_call_operand.vmem [shape: bf16[9,64,128], index: 1, kind: input, shape index: {}]
  %s2 = inlined_call_operand.vmem [shape: f32[1,128], index: 2, kind: input, shape index: {}]
  %s3 = inlined_call_operand.vmem [shape: f32[1,128], index: 3, kind: input, shape index: {}]
  %s4 = inlined_call_operand.hbm [shape: f32[2,64,128], index: 4, kind: output, shape index: {}]
  %s5 = sld [smem:[#allocation0]]
  $region49: #{tpu_custom_call.1} parent=0
    _
  %s7 = ssub.s32 1, %s5
  %s8 = scalar_select 0, %s7, %s5
  $region1: #{tpu_custom_call.1} parent=0
    #allocation2 [shape = 'u8[65536]{0}', space=vmem, size = 0x10000, scoped, tag = 'output window, operand 0']
    #allocation3 [shape = 's32[2]{0}', space=sflag, size = 0x8, scoped, tag = 'scoped memory for tpu_custom_call.1']
    %9 = vsyncpa [#allocation3], 0
    %s10 = scalar_lea.sflag [#allocation3], 1
    %11 = vsyncpa %s10, 0
    loop: start=0, step=1, limit=4
    $region2: #{tpu_custom_call.1} parent=1 // loop_pre_header
      _
    $region3: #{tpu_custom_call.1} parent=1 // loop_header
      %s13 = sphi 0, %s17
      %p14 = scmp.ge.s32.totalorder %s13, 4
      %s23 = sphi 0, %s25
      %s26 = sphi 0, %s23
      %s27 = sphi 0, %s26
      %s43 = sphi 0, %s27
      %s47 = sphi 0, %s47
      %s49 = sphi 0, %s47
      %s50 = sphi 0, %s49
      %s64 = sphi 0, %s50
      %s68 = sphi 0, %s68
      %s70 = sphi 0, %s68
      %s71 = sphi 0, %s70
      %s85 = sphi 0, %s71
      %s89 = sphi 0, %s89
      %s91 = sphi 0, %s89
      %s92 = sphi 0, %s91
      %s106 = sphi 0, %s92
      %s112 = sphi 0, %s114
      %s115 = sphi 0, %s112
      %s116 = sphi 0, %s115
      %s132 = sphi 0, %s116
    $region4: #{tpu_custom_call.1} parent=1 // loop_header_branch
      %16 = sbr.rel (%p14) target = $region8
    $region5: #{tpu_custom_call.1} parent=1 // loop_body
      %s18 = ssub.s32 %s13, 1
      %s19 = ssub.s32 %s13, 2
      %s20 = sadd.s32 %s13, 1
      %s21 = ssub.s32 %s13, %s20
      %p22 = scmp.eq.s32.totalorder %s21, 0
      %s24 = sadd.s32 %s23, 1
      %s25 = scalar_select %p22, %s23, %s24
      %p28 = pneg %p22
      %p29 = scmp.eq.s32.totalorder %s13, 1
      %p30 = por %p28, %p29
      %p31 = scmp.ne.s32.totalorder %s23, %s26
      %p32 = scmp.eq.s32.totalorder %s13, 0
      %p33 = por %p31, %p32
      %p34 = scmp.ne.s32.totalorder %s23, %s26
      %p35 = scmp.eq.s32.totalorder %s18, 1
      %p36 = por %p34, %p35
      %p37 = scmp.ne.s32.totalorder %s26, %s27
      %p38 = scmp.eq.s32.totalorder %s18, 0
      %p39 = por %p37, %p38
      %p40 = scmp.ne.s32.totalorder %s26, %s27
      %p41 = scmp.eq.s32.totalorder %s19, 1
      %p42 = por %p40, %p41
      %p44 = scmp.ne.s32.totalorder %s27, %s43
      %p45 = scmp.eq.s32.totalorder %s19, 0
      %p46 = por %p44, %p45
      %s48 = sadd.s32 %s47, 1
      %p51 = scmp.eq.s32.totalorder %s13, 1
      %p52 = scmp.ne.s32.totalorder %s47, %s49
      %p53 = scmp.eq.s32.totalorder %s13, 0
      %p54 = por %p52, %p53
      %p55 = scmp.ne.s32.totalorder %s47, %s49
      %p56 = scmp.eq.s32.totalorder %s18, 1
      %p57 = por %p55, %p56
      %p58 = scmp.ne.s32.totalorder %s49, %s50
      %p59 = scmp.eq.s32.totalorder %s18, 0
      %p60 = por %p58, %p59
      %p61 = scmp.ne.s32.totalorder %s49, %s50
      %p62 = scmp.eq.s32.totalorder %s19, 1
      %p63 = por %p61, %p62
      %p65 = scmp.ne.s32.totalorder %s50, %s64
      %p66 = scmp.eq.s32.totalorder %s19, 0
      %p67 = por %p65, %p66
      %s69 = sadd.s32 %s68, 1
      %p72 = scmp.eq.s32.totalorder %s13, 1
      %p73 = scmp.ne.s32.totalorder %s68, %s70
      %p74 = scmp.eq.s32.totalorder %s13, 0
      %p75 = por %p73, %p74
      %p76 = scmp.ne.s32.totalorder %s68, %s70
      %p77 = scmp.eq.s32.totalorder %s18, 1
      %p78 = por %p76, %p77
      %p79 = scmp.ne.s32.totalorder %s70, %s71
      %p80 = scmp.eq.s32.totalorder %s18, 0
      %p81 = por %p79, %p80
      %p82 = scmp.ne.s32.totalorder %s70, %s71
      %p83 = scmp.eq.s32.totalorder %s19, 1
      %p84 = por %p82, %p83
      %p86 = scmp.ne.s32.totalorder %s71, %s85
      %p87 = scmp.eq.s32.totalorder %s19, 0
      %p88 = por %p86, %p87
      %s90 = sadd.s32 %s89, 1
      %p93 = scmp.eq.s32.totalorder %s13, 1
      %p94 = scmp.ne.s32.totalorder %s89, %s91
      %p95 = scmp.eq.s32.totalorder %s13, 0
      %p96 = por %p94, %p95
      %p97 = scmp.ne.s32.totalorder %s89, %s91
      %p98 = scmp.eq.s32.totalorder %s18, 1
      %p99 = por %p97, %p98
      %p100 = scmp.ne.s32.totalorder %s91, %s92
      %p101 = scmp.eq.s32.totalorder %s18, 0
      %p102 = por %p100, %p101
      %p103 = scmp.ne.s32.totalorder %s91, %s92
      %p104 = scmp.eq.s32.totalorder %s19, 1
      %p105 = por %p103, %p104
      %p107 = scmp.ne.s32.totalorder %s92, %s106
      %p108 = scmp.eq.s32.totalorder %s19, 0
      %p109 = por %p107, %p108
      %s110 = ssub.s32 %s13, %s20
      %p111 = scmp.eq.s32.totalorder %s110, 0
      %s113 = sadd.s32 %s112, 1
      %s114 = scalar_select %p111, %s112, %s113
      %p117 = pneg %p111
      %p118 = scmp.eq.s32.totalorder %s13, 1
      %p119 = por %p117, %p118
      %p120 = scmp.ne.s32.totalorder %s112, %s115
      %p121 = scmp.eq.s32.totalorder %s13, 0
      %p122 = por %p120, %p121
      %p123 = scmp.ne.s32.totalorder %s112, %s115
      %p124 = scmp.eq.s32.totalorder %s18, 1
      %p125 = por %p123, %p124
      %p126 = scmp.ne.s32.totalorder %s115, %s116
      %p127 = scmp.eq.s32.totalorder %s18, 0
      %p128 = por %p126, %p127
      %p129 = scmp.ne.s32.totalorder %s115, %s116
      %p130 = scmp.eq.s32.totalorder %s19, 1
      %p131 = por %p129, %p130
      %p133 = scmp.ne.s32.totalorder %s116, %s132
      %p134 = scmp.eq.s32.totalorder %s19, 0
      %p135 = por %p133, %p134
      %p136 = scmp.le.s32.totalorder 1, %s13
      %p137 = scmp.lt.s32.totalorder %s13, 3
      %p138 = pnand %p136, %p137
      %p139 = pneg %p138
      // Predicated region
      $region9: #{tpu_custom_call.1} parent=5 // pred_check
        _
      $region10: #{tpu_custom_call.1} parent=5 // pred_check_branch
        %141 = sbr.rel (%p138) target = $region12
      $region11: #{tpu_custom_call.1} parent=5 // pred_region
        %s142 = ssub.s32 %s13, 1
        // Predicated region
        $region13: #{tpu_custom_call.1} parent=11 // pred_check
          %p143 = pneg %p60
        $region14: #{tpu_custom_call.1} parent=11 // pred_check_branch
          %145 = sbr.rel (%p143) target = $region16
        $region15: #{tpu_custom_call.1} parent=11 // pred_region
          _
        $region16: #{tpu_custom_call.1} parent=11 // pred_fallthru
          _
        // Predicated region
        $region17: #{tpu_custom_call.1} parent=11 // pred_check
          %p146 = pneg %p81
        $region18: #{tpu_custom_call.1} parent=11 // pred_check_branch
          %148 = sbr.rel (%p146) target = $region20
        $region19: #{tpu_custom_call.1} parent=11 // pred_region
          _
        $region20: #{tpu_custom_call.1} parent=11 // pred_fallthru
          _
        // Predicated region
        $region21: #{tpu_custom_call.1} parent=11 // pred_check
          %p149 = pneg %p102
        $region22: #{tpu_custom_call.1} parent=11 // pred_check_branch
          %151 = sbr.rel (%p149) target = $region24
        $region23: #{tpu_custom_call.1} parent=11 // pred_region
          _
        $region24: #{tpu_custom_call.1} parent=11 // pred_fallthru
          _
      $region12: #{tpu_custom_call.1} parent=5 // pred_fallthru
        _
      %p152 = scmp.lt.s32.totalorder %s13, 2
      // Predicated region
      $region25: #{tpu_custom_call.1} parent=5 // pred_check
        %p153 = pneg %p152
      $region26: #{tpu_custom_call.1} parent=5 // pred_check_branch
        %155 = sbr.rel (%p153) target = $region28
      $region27: #{tpu_custom_call.1} parent=5 // pred_region
        // Predicated region
        $region29: #{tpu_custom_call.1} parent=27 // pred_check
          %p156 = pneg %p33
        $region30: #{tpu_custom_call.1} parent=27 // pred_check_branch
          %158 = sbr.rel (%p156) target = $region32
        $region31: #{tpu_custom_call.1} parent=27 // pred_region
          %p159 = scmp.lt.s32.totalorder %s13, 1
          %s160 = scalar_select %p159, %s13, 1
          %s161 = smul.addr %s160, 72
          %s162 = smul.addr %s161, 8
          %s163 = scalar_lea.vmem %s0, %s162
        $region32: #{tpu_custom_call.1} parent=27 // pred_fallthru
          _
      $region28: #{tpu_custom_call.1} parent=5 // pred_fallthru
        _
      %p164 = scmp.le.s32.totalorder 1, %s13
      %p165 = scmp.lt.s32.totalorder %s13, 3
      %p166 = pnand %p164, %p165
      %p167 = pneg %p166
      // Predicated region
      $region33: #{tpu_custom_call.1} parent=5 // pred_check
        _
      $region34: #{tpu_custom_call.1} parent=5 // pred_check_branch
        %169 = sbr.rel (%p166) target = $region36
      $region35: #{tpu_custom_call.1} parent=5 // pred_region
        %s170 = ssub.s32 %s13, 1
        %p171 = scmp.lt.s32.totalorder %s18, 1
        %s172 = scalar_select %p171, %s18, 1
        %s173 = smul.addr %s172, 72
        %s174 = smul.addr %s173, 8
        %s175 = scalar_lea.vmem %s0, %s174
        %p176 = pneg %p39
        %p177 = pneg %p36
        %p178 = pneg %p60
        %p179 = pneg %p57
        %p180 = pneg %p81
        %p181 = pneg %p78
        %p182 = pneg %p102
        %p183 = pneg %p99
        %p184 = pneg %p128
        %p185 = pneg %p125
        %s186 = sand.u32 %s115, 1
        %s187 = scalar_lea.sflag [#allocation3], %s186
        %s188 = sand.u32 %s115, 1
        %s189 = smul.addr %s188, 64
        %s190 = scalar_lea.vmem [#allocation2], %s189
        %p191 = scmp.lt.s32.totalorder %s18, 1
        %s192 = scalar_select %p191, %s18, 1
        %s193 = smul.addr %s192, 72
        %s194 = smul.addr %s193, 8
        %s195 = scalar_lea.vmem %s0, %s194
        %v197 = vld [vmem:[%s195] sm:$0xff]
        %v198 = vld [vmem:[%s195 + $0x10] sm:$0xff]
        %v199 = vld [vmem:[%s195 + $0x20] sm:$0xff]
        %v200 = vld [vmem:[%s195 + $0x30] sm:$0xff]
        %v201 = vld [vmem:[%s195 + $0x40] sm:$0xff]
        %v202 = vld [vmem:[%s195 + $0x50] sm:$0xff]
        %v203 = vld [vmem:[%s195 + $0x60] sm:$0xff]
        %v204 = vld [vmem:[%s195 + $0x70] sm:$0xff]
        %v205 = vpack.c.bf16 %v198, %v197
        %v206 = vpack.c.bf16 %v200, %v199
        %v207 = vpack.c.bf16 %v202, %v201
        %v208 = vpack.c.bf16 %v204, %v203
        %v209 = vld [vmem:[%s1] sm:$0xf]
        %v210 = vld [vmem:[%s1 + $0x4] sm:$0xf]
        %v211 = vld [vmem:[%s1 + $0x8] sm:$0xf]
        %v212 = vld [vmem:[%s1 + $0xc] sm:$0xf]
        %v213 = vld [vmem:[%s1 + $0x10] sm:$0xf]
        %v214 = vld [vmem:[%s1 + $0x14] sm:$0xf]
        %v215 = vld [vmem:[%s1 + $0x18] sm:$0xf]
        %v216 = vld [vmem:[%s1 + $0x1c] sm:$0xf]
        %s217 = scalar_lea.vmem %s195, 144
        %v218 = vld [vmem:[%s217] sm:$0xff]
        %v219 = vld [vmem:[%s217 + $0x10] sm:$0xff]
        %v220 = vld [vmem:[%s217 + $0x20] sm:$0xff]
        %v221 = vld [vmem:[%s217 + $0x30] sm:$0xff]
        %v222 = vld [vmem:[%s217 + $0x40] sm:$0xff]
        %v223 = vld [vmem:[%s217 + $0x50] sm:$0xff]
        %v224 = vld [vmem:[%s217 + $0x60] sm:$0xff]
        %v225 = vld [vmem:[%s217 + $0x70] sm:$0xff]
        %v226 = vpack.c.bf16 %v219, %v218
        %v227 = vpack.c.bf16 %v221, %v220
        %v228 = vpack.c.bf16 %v223, %v222
        %v229 = vpack.c.bf16 %v225, %v224
        %s230 = scalar_lea.vmem %s1, 32
        %v231 = vld [vmem:[%s230] sm:$0xf]
        %v232 = vld [vmem:[%s230 + $0x4] sm:$0xf]
        %v233 = vld [vmem:[%s230 + $0x8] sm:$0xf]
        %v234 = vld [vmem:[%s230 + $0xc] sm:$0xf]
        %v235 = vld [vmem:[%s230 + $0x10] sm:$0xf]
        %v236 = vld [vmem:[%s230 + $0x14] sm:$0xf]
        %v237 = vld [vmem:[%s230 + $0x18] sm:$0xf]
        %v238 = vld [vmem:[%s230 + $0x1c] sm:$0xf]
        %v247 = vunpack.c.l.b16 %v231
        %v248 = vunpack.c.l.b16 %v232
        %v249 = vunpack.c.l.b16 %v233
        %v250 = vunpack.c.l.b16 %v234
        %v251 = vunpack.c.l.b16 %v235
        %v252 = vunpack.c.l.b16 %v236
        %v253 = vunpack.c.l.b16 %v237
        %v254 = vunpack.c.l.b16 %v238
        %v255 = vpack.c.b16 %v248, %v247
        %v256 = vpack.c.b16 %v250, %v249
        %v257 = vpack.c.b16 %v252, %v251
        %v258 = vpack.c.b16 %v254, %v253
        %vm263 = vcmask 523264
        %v265 = vsel %vm263, %v226, 0
        %v268 = vsel %vm263, %v227, 0
        %v271 = vsel %vm263, %v228, 0
        %v274 = vsel %vm263, %v229, 0
        %276 = vmatprep.subr.bf16.mxu0 0
        %277 = vmatpush1.bf16.msra.mxu0 %v255
        %278 = vmatprep.subr.bf16.mxu0 0
        %279 = vmatpush1.bf16.msra.mxu0 %v256
        %280 = vmatprep.subr.bf16.mxu0 0
        %281 = vmatpush1.bf16.msra.mxu0 %v257
        %282 = vmatprep.subr.bf16.mxu0 0
        %283 = vmatpush1.bf16.msra.mxu0 %v258
        %284 = vmatprep.subr.bf16.mxu0 0
        %285 = vmatpush1.bf16.msra.mxu0 0
        %286 = vmatprep.subr.bf16.mxu0 0
        %287 = vmatpush1.bf16.msra.mxu0 0
        %288 = vmatprep.subr.bf16.mxu0 0
        %289 = vmatpush1.bf16.msra.mxu0 0
        %290 = vmatprep.subr.bf16.mxu0 0
        %291 = vmatpush1.bf16.msra.mxu0 0
        %292 = vmatprep.subr.bf16.mxu0 0
        %293 = vmatpush1.bf16.msra.mxu0 0
        %294 = vmatprep.subr.bf16.mxu0 0
        %295 = vmatpush1.bf16.msra.mxu0 0
        %296 = vmatprep.subr.bf16.mxu0 0
        %297 = vmatpush1.bf16.msra.mxu0 0
        %298 = vmatprep.subr.bf16.mxu0 0
        %299 = vmatpush1.bf16.msra.mxu0 0
        %300 = vmatprep.subr.bf16.mxu0 0
        %301 = vmatpush1.bf16.msra.mxu0 0
        %302 = vmatprep.subr.bf16.mxu0 0
        %303 = vmatpush1.bf16.msra.mxu0 0
        %304 = vmatprep.subr.bf16.mxu0 0
        %305 = vmatpush1.bf16.msra.mxu0 0
        %306 = vmatprep.subr.bf16.mxu0 0
        %307 = vmatpush1.bf16.msra.mxu0 0
        %308 = vmatprep.mubr.bf16.mxu0 0
        %309 = vmatmul.mubr.bf16.gmra.mrb[0].mxu0 %v265
        %v310 = vpop.f32.mrb[0].mxu0
        %v311 = vadd.f32 0.0, %v310
        %v312 = vpop.f32.mrb[0].mxu0
        %v313 = vpop.f32.mrb[0].mxu0
        %v314 = vadd.f32 0.0, %v313
        %v315 = vpop.f32.mrb[0].mxu0
        %316 = vmatprep.mubr.bf16.mxu0 0
        %317 = vmatmul.mubr.bf16.gmra.mrb[0].mxu0 %v268
        %v318 = vpop.f32.mrb[0].mxu0
        %v319 = vadd.f32 0.0, %v318
        %v320 = vpop.f32.mrb[0].mxu0
        %v321 = vpop.f32.mrb[0].mxu0
        %v322 = vadd.f32 0.0, %v321
        %v323 = vpop.f32.mrb[0].mxu0
        %324 = vmatprep.mubr.bf16.mxu0 0
        %325 = vmatmul.mubr.bf16.gmra.mrb[0].mxu0 %v271
        %v326 = vpop.f32.mrb[0].mxu0
        %v327 = vadd.f32 0.0, %v326
        %v328 = vpop.f32.mrb[0].mxu0
        %v329 = vpop.f32.mrb[0].mxu0
        %v330 = vadd.f32 0.0, %v329
        %v331 = vpop.f32.mrb[0].mxu0
        %332 = vmatprep.mubr.bf16.mxu0 0
        %333 = vmatmul.mubr.bf16.gmra.mrb[0].mxu0 %v274
        %v334 = vpop.f32.mrb[0].mxu0
        %v335 = vadd.f32 0.0, %v334
        %v336 = vpop.f32.mrb[0].mxu0
        %v337 = vpop.f32.mrb[0].mxu0
        %v338 = vadd.f32 0.0, %v337
        %v339 = vpop.f32.mrb[0].mxu0
        %340 = vdwg.mxu0
        %v349 = vunpack.c.l.b16 %v209
        %v350 = vunpack.c.l.b16 %v210
        %v351 = vunpack.c.l.b16 %v211
        %v352 = vunpack.c.l.b16 %v212
        %v353 = vunpack.c.l.b16 %v213
        %v354 = vunpack.c.l.b16 %v214
        %v355 = vunpack.c.l.b16 %v215
        %v356 = vunpack.c.l.b16 %v216
        %v357 = vpack.c.b16 %v350, %v349
        %v358 = vpack.c.b16 %v352, %v351
        %v359 = vpack.c.b16 %v354, %v353
        %v360 = vpack.c.b16 %v356, %v355
        %v366 = vsel %vm263, %v205, 0
        %v369 = vsel %vm263, %v206, 0
        %v372 = vsel %vm263, %v207, 0
        %v375 = vsel %vm263, %v208, 0
        %377 = vmatprep.subr.bf16.mxu0 0
        %378 = vmatpush1.bf16.msra.mxu0 %v357
        %379 = vmatprep.subr.bf16.mxu0 0
        %380 = vmatpush1.bf16.msra.mxu0 %v358
        %381 = vmatprep.subr.bf16.mxu0 0
        %382 = vmatpush1.bf16.msra.mxu0 %v359
        %383 = vmatprep.subr.bf16.mxu0 0
        %384 = vmatpush1.bf16.msra.mxu0 %v360
        %385 = vmatprep.subr.bf16.mxu0 0
        %386 = vmatpush1.bf16.msra.mxu0 0
        %387 = vmatprep.subr.bf16.mxu0 0
        %388 = vmatpush1.bf16.msra.mxu0 0
        %389 = vmatprep.subr.bf16.mxu0 0
        %390 = vmatpush1.bf16.msra.mxu0 0
        %391 = vmatprep.subr.bf16.mxu0 0
        %392 = vmatpush1.bf16.msra.mxu0 0
        %393 = vmatprep.subr.bf16.mxu0 0
        %394 = vmatpush1.bf16.msra.mxu0 0
        %395 = vmatprep.subr.bf16.mxu0 0
        %396 = vmatpush1.bf16.msra.mxu0 0
        %397 = vmatprep.subr.bf16.mxu0 0
        %398 = vmatpush1.bf16.msra.mxu0 0
        %399 = vmatprep.subr.bf16.mxu0 0
        %400 = vmatpush1.bf16.msra.mxu0 0
        %401 = vmatprep.subr.bf16.mxu0 0
        %402 = vmatpush1.bf16.msra.mxu0 0
        %403 = vmatprep.subr.bf16.mxu0 0
        %404 = vmatpush1.bf16.msra.mxu0 0
        %405 = vmatprep.subr.bf16.mxu0 0
        %406 = vmatpush1.bf16.msra.mxu0 0
        %407 = vmatprep.subr.bf16.mxu0 0
        %408 = vmatpush1.bf16.msra.mxu0 0
        %409 = vmatprep.mubr.bf16.mxu0 0
        %410 = vmatmul.mubr.bf16.gmra.mrb[0].mxu0 %v366
        %v411 = vpop.f32.mrb[0].mxu0
        %v412 = vadd.f32 %v311, %v411
        %v413 = vpop.f32.mrb[0].mxu0
        %v414 = vpop.f32.mrb[0].mxu0
        %v415 = vadd.f32 %v314, %v414
        %v416 = vpop.f32.mrb[0].mxu0
        %417 = vmatprep.mubr.bf16.mxu0 0
        %418 = vmatmul.mubr.bf16.gmra.mrb[0].mxu0 %v369
        %v419 = vpop.f32.mrb[0].mxu0
        %v420 = vadd.f32 %v319, %v419
        %v421 = vpop.f32.mrb[0].mxu0
        %v422 = vpop.f32.mrb[0].mxu0
        %v423 = vadd.f32 %v322, %v422
        %v424 = vpop.f32.mrb[0].mxu0
        %425 = vmatprep.mubr.bf16.mxu0 0
        %426 = vmatmul.mubr.bf16.gmra.mrb[0].mxu0 %v372
        %v427 = vpop.f32.mrb[0].mxu0
        %v428 = vadd.f32 %v327, %v427
        %v429 = vpop.f32.mrb[0].mxu0
        %v430 = vpop.f32.mrb[0].mxu0
        %v431 = vadd.f32 %v330, %v430
        %v432 = vpop.f32.mrb[0].mxu0
        %433 = vmatprep.mubr.bf16.mxu0 0
        %434 = vmatmul.mubr.bf16.gmra.mrb[0].mxu0 %v375
        %v435 = vpop.f32.mrb[0].mxu0
        %v436 = vadd.f32 %v335, %v435
        %v437 = vpop.f32.mrb[0].mxu0
        %v438 = vpop.f32.mrb[0].mxu0
        %v439 = vadd.f32 %v338, %v438
        %v440 = vpop.f32.mrb[0].mxu0
        %441 = vdwg.mxu0
        %v442 = vld [vmem:[%s195 + $0x1] sm:$0xff]
        %v443 = vld [vmem:[%s195 + $0x11] sm:$0xff]
        %v444 = vld [vmem:[%s195 + $0x21] sm:$0xff]
        %v445 = vld [vmem:[%s195 + $0x31] sm:$0xff]
        %v446 = vld [vmem:[%s195 + $0x41] sm:$0xff]
        %v447 = vld [vmem:[%s195 + $0x51] sm:$0xff]
        %v448 = vld [vmem:[%s195 + $0x61] sm:$0xff]
        %v449 = vld [vmem:[%s195 + $0x71] sm:$0xff]
        %v450 = vpack.c.bf16 %v443, %v442
        %v451 = vpack.c.bf16 %v445, %v444
        %v452 = vpack.c.bf16 %v447, %v446
        %v453 = vpack.c.bf16 %v449, %v448
        %s454 = scalar_lea.vmem %s1, 64
        %v455 = vld [vmem:[%s454] sm:$0xf]
        %v456 = vld [vmem:[%s454 + $0x4] sm:$0xf]
        %v457 = vld [vmem:[%s454 + $0x8] sm:$0xf]
        %v458 = vld [vmem:[%s454 + $0xc] sm:$0xf]
        %v459 = vld [vmem:[%s454 + $0x10] sm:$0xf]
        %v460 = vld [vmem:[%s454 + $0x14] sm:$0xf]
        %v461 = vld [vmem:[%s454 + $0x18] sm:$0xf]
        %v462 = vld [vmem:[%s454 + $0x1c] sm:$0xf]
        %v471 = vunpack.c.l.b16 %v455
        %v472 = vunpack.c.l.b16 %v456
        %v473 = vunpack.c.l.b16 %v457
        %v474 = vunpack.c.l.b16 %v458
        %v475 = vunpack.c.l.b16 %v459
        %v476 = vunpack.c.l.b16 %v460
        %v477 = vunpack.c.l.b16 %v461
        %v478 = vunpack.c.l.b16 %v462
        %v479 = vpack.c.b16 %v472, %v471
        %v480 = vpack.c.b16 %v474, %v473
        %v481 = vpack.c.b16 %v476, %v475
        %v482 = vpack.c.b16 %v478, %v477
        %v488 = vsel %vm263, %v450, 0
        %v491 = vsel %vm263, %v451, 0
        %v494 = vsel %vm263, %v452, 0
        %v497 = vsel %vm263, %v453, 0
        %499 = vmatprep.subr.bf16.mxu0 0
        %500 = vmatpush1.bf16.msra.mxu0 %v479
        %501 = vmatprep.subr.bf16.mxu0 0
        %502 = vmatpush1.bf16.msra.mxu0 %v480
        %503 = vmatprep.subr.bf16.mxu0 0
        %504 = vmatpush1.bf16.msra.mxu0 %v481
        %505 = vmatprep.subr.bf16.mxu0 0
        %506 = vmatpush1.bf16.msra.mxu0 %v482
        %507 = vmatprep.subr.bf16.mxu0 0
        %508 = vmatpush1.bf16.msra.mxu0 0
        %509 = vmatprep.subr.bf16.mxu0 0
        %510 = vmatpush1.bf16.msra.mxu0 0
        %511 = vmatprep.subr.bf16.mxu0 0
        %512 = vmatpush1.bf16.msra.mxu0 0
        %513 = vmatprep.subr.bf16.mxu0 0
        %514 = vmatpush1.bf16.msra.mxu0 0
        %515 = vmatprep.subr.bf16.mxu0 0
        %516 = vmatpush1.bf16.msra.mxu0 0
        %517 = vmatprep.subr.bf16.mxu0 0
        %518 = vmatpush1.bf16.msra.mxu0 0
        %519 = vmatprep.subr.bf16.mxu0 0
        %520 = vmatpush1.bf16.msra.mxu0 0
        %521 = vmatprep.subr.bf16.mxu0 0
        %522 = vmatpush1.bf16.msra.mxu0 0
        %523 = vmatprep.subr.bf16.mxu0 0
        %524 = vmatpush1.bf16.msra.mxu0 0
        %525 = vmatprep.subr.bf16.mxu0 0
        %526 = vmatpush1.bf16.msra.mxu0 0
        %527 = vmatprep.subr.bf16.mxu0 0
        %528 = vmatpush1.bf16.msra.mxu0 0
        %529 = vmatprep.subr.bf16.mxu0 0
        %530 = vmatpush1.bf16.msra.mxu0 0
        %531 = vmatprep.mubr.bf16.mxu0 0
        %532 = vmatmul.mubr.bf16.gmra.mrb[0].mxu0 %v488
        %v533 = vpop.f32.mrb[0].mxu0
        %v534 = vadd.f32 0.0, %v533
        %v535 = vpop.f32.mrb[0].mxu0
        %v536 = vpop.f32.mrb[0].mxu0
        %v537 = vadd.f32 0.0, %v536
        %v538 = vpop.f32.mrb[0].mxu0
        %539 = vmatprep.mubr.bf16.mxu0 0
        %540 = vmatmul.mubr.bf16.gmra.mrb[0].mxu0 %v491
        %v541 = vpop.f32.mrb[0].mxu0
        %v542 = vadd.f32 0.0, %v541
        %v543 = vpop.f32.mrb[0].mxu0
        %v544 = vpop.f32.mrb[0].mxu0
        %v545 = vadd.f32 0.0, %v544
        %v546 = vpop.f32.mrb[0].mxu0
        %547 = vmatprep.mubr.bf16.mxu0 0
        %548 = vmatmul.mubr.bf16.gmra.mrb[0].mxu0 %v494
        %v549 = vpop.f32.mrb[0].mxu0
        %v550 = vadd.f32 0.0, %v549
        %v551 = vpop.f32.mrb[0].mxu0
        %v552 = vpop.f32.mrb[0].mxu0
        %v553 = vadd.f32 0.0, %v552
        %v554 = vpop.f32.mrb[0].mxu0
        %555 = vmatprep.mubr.bf16.mxu0 0
        %556 = vmatmul.mubr.bf16.gmra.mrb[0].mxu0 %v497
        %v557 = vpop.f32.mrb[0].mxu0
        %v558 = vadd.f32 0.0, %v557
        %v559 = vpop.f32.mrb[0].mxu0
        %v560 = vpop.f32.mrb[0].mxu0
        %v561 = vadd.f32 0.0, %v560
        %v562 = vpop.f32.mrb[0].mxu0
        %563 = vdwg.mxu0
        %v564 = vadd.f32 %v412, %v534
        %v565 = vadd.f32 %v415, %v537
        %v566 = vadd.f32 %v420, %v542
        %v567 = vadd.f32 %v423, %v545
        %v568 = vadd.f32 %v428, %v550
        %v569 = vadd.f32 %v431, %v553
        %v570 = vadd.f32 %v436, %v558
        %v571 = vadd.f32 %v439, %v561
        %s572 = scalar_lea.vmem %s195, 288
        %v573 = vld [vmem:[%s572] sm:$0xff]
        %v574 = vld [vmem:[%s572 + $0x10] sm:$0xff]
        %v575 = vld [vmem:[%s572 + $0x20] sm:$0xff]
        %v576 = vld [vmem:[%s572 + $0x30] sm:$0xff]
        %v577 = vld [vmem:[%s572 + $0x40] sm:$0xff]
        %v578 = vld [vmem:[%s572 + $0x50] sm:$0xff]
        %v579 = vld [vmem:[%s572 + $0x60] sm:$0xff]
        %v580 = vld [vmem:[%s572 + $0x70] sm:$0xff]
        %v581 = vpack.c.bf16 %v574, %v573
        %v582 = vpack.c.bf16 %v576, %v575
        %v583 = vpack.c.bf16 %v578, %v577
        %v584 = vpack.c.bf16 %v580, %v579
        %s585 = scalar_lea.vmem %s1, 96
        %v586 = vld [vmem:[%s585] sm:$0xf]
        %v587 = vld [vmem:[%s585 + $0x4] sm:$0xf]
        %v588 = vld [vmem:[%s585 + $0x8] sm:$0xf]
        %v589 = vld [vmem:[%s585 + $0xc] sm:$0xf]
        %v590 = vld [vmem:[%s585 + $0x10] sm:$0xf]
        %v591 = vld [vmem:[%s585 + $0x14] sm:$0xf]
        %v592 = vld [vmem:[%s585 + $0x18] sm:$0xf]
        %v593 = vld [vmem:[%s585 + $0x1c] sm:$0xf]
        %v602 = vunpack.c.l.b16 %v586
        %v603 = vunpack.c.l.b16 %v587
        %v604 = vunpack.c.l.b16 %v588
        %v605 = vunpack.c.l.b16 %v589
        %v606 = vunpack.c.l.b16 %v590
        %v607 = vunpack.c.l.b16 %v591
        %v608 = vunpack.c.l.b16 %v592
        %v609 = vunpack.c.l.b16 %v593
        %v610 = vpack.c.b16 %v603, %v602
        %v611 = vpack.c.b16 %v605, %v604
        %v612 = vpack.c.b16 %v607, %v606
        %v613 = vpack.c.b16 %v609, %v608
        %v619 = vsel %vm263, %v581, 0
        %v622 = vsel %vm263, %v582, 0
        %v625 = vsel %vm263, %v583, 0
        %v628 = vsel %vm263, %v584, 0
        %630 = vmatprep.subr.bf16.mxu0 0
        %631 = vmatpush1.bf16.msra.mxu0 %v610
        %632 = vmatprep.subr.bf16.mxu0 0
        %633 = vmatpush1.bf16.msra.mxu0 %v611
        %634 = vmatprep.subr.bf16.mxu0 0
        %635 = vmatpush1.bf16.msra.mxu0 %v612
        %636 = vmatprep.subr.bf16.mxu0 0
        %637 = vmatpush1.bf16.msra.mxu0 %v613
        %638 = vmatprep.subr.bf16.mxu0 0
        %639 = vmatpush1.bf16.msra.mxu0 0
        %640 = vmatprep.subr.bf16.mxu0 0
        %641 = vmatpush1.bf16.msra.mxu0 0
        %642 = vmatprep.subr.bf16.mxu0 0
        %643 = vmatpush1.bf16.msra.mxu0 0
        %644 = vmatprep.subr.bf16.mxu0 0
        %645 = vmatpush1.bf16.msra.mxu0 0
        %646 = vmatprep.subr.bf16.mxu0 0
        %647 = vmatpush1.bf16.msra.mxu0 0
        %648 = vmatprep.subr.bf16.mxu0 0
        %649 = vmatpush1.bf16.msra.mxu0 0
        %650 = vmatprep.subr.bf16.mxu0 0
        %651 = vmatpush1.bf16.msra.mxu0 0
        %652 = vmatprep.subr.bf16.mxu0 0
        %653 = vmatpush1.bf16.msra.mxu0 0
        %654 = vmatprep.subr.bf16.mxu0 0
        %655 = vmatpush1.bf16.msra.mxu0 0
        %656 = vmatprep.subr.bf16.mxu0 0
        %657 = vmatpush1.bf16.msra.mxu0 0
        %658 = vmatprep.subr.bf16.mxu0 0
        %659 = vmatpush1.bf16.msra.mxu0 0
        %660 = vmatprep.subr.bf16.mxu0 0
        %661 = vmatpush1.bf16.msra.mxu0 0
        %662 = vmatprep.mubr.bf16.mxu0 0
        %663 = vmatmul.mubr.bf16.gmra.mrb[0].mxu0 %v619
        %v664 = vpop.f32.mrb[0].mxu0
        %v665 = vadd.f32 0.0, %v664
        %v666 = vpop.f32.mrb[0].mxu0
        %v667 = vpop.f32.mrb[0].mxu0
        %v668 = vadd.f32 0.0, %v667
        %v669 = vpop.f32.mrb[0].mxu0
        %670 = vmatprep.mubr.bf16.mxu0 0
        %671 = vmatmul.mubr.bf16.gmra.mrb[0].mxu0 %v622
        %v672 = vpop.f32.mrb[0].mxu0
        %v673 = vadd.f32 0.0, %v672
        %v674 = vpop.f32.mrb[0].mxu0
        %v675 = vpop.f32.mrb[0].mxu0
        %v676 = vadd.f32 0.0, %v675
        %v677 = vpop.f32.mrb[0].mxu0
        %678 = vmatprep.mubr.bf16.mxu0 0
        %679 = vmatmul.mubr.bf16.gmra.mrb[0].mxu0 %v625
        %v680 = vpop.f32.mrb[0].mxu0
        %v681 = vadd.f32 0.0, %v680
        %v682 = vpop.f32.mrb[0].mxu0
        %v683 = vpop.f32.mrb[0].mxu0
        %v684 = vadd.f32 0.0, %v683
        %v685 = vpop.f32.mrb[0].mxu0
        %686 = vmatprep.mubr.bf16.mxu0 0
        %687 = vmatmul.mubr.bf16.gmra.mrb[0].mxu0 %v628
        %v688 = vpop.f32.mrb[0].mxu0
        %v689 = vadd.f32 0.0, %v688
        %v690 = vpop.f32.mrb[0].mxu0
        %v691 = vpop.f32.mrb[0].mxu0
        %v692 = vadd.f32 0.0, %v691
        %v693 = vpop.f32.mrb[0].mxu0
        %694 = vdwg.mxu0
        %v695 = vadd.f32 %v564, %v665
        %v696 = vadd.f32 %v565, %v668
        %v697 = vadd.f32 %v566, %v673
        %v698 = vadd.f32 %v567, %v676
        %v699 = vadd.f32 %v568, %v681
        %v700 = vadd.f32 %v569, %v684
        %v701 = vadd.f32 %v570, %v689
        %v702 = vadd.f32 %v571, %v692
        %s703 = scalar_lea.vmem %s195, 432
        %v704 = vld [vmem:[%s703] sm:$0xff]
        %v705 = vld [vmem:[%s703 + $0x10] sm:$0xff]
        %v706 = vld [vmem:[%s703 + $0x20] sm:$0xff]
        %v707 = vld [vmem:[%s703 + $0x30] sm:$0xff]
        %v708 = vld [vmem:[%s703 + $0x40] sm:$0xff]
        %v709 = vld [vmem:[%s703 + $0x50] sm:$0xff]
        %v710 = vld [vmem:[%s703 + $0x60] sm:$0xff]
        %v711 = vld [vmem:[%s703 + $0x70] sm:$0xff]
        %v712 = vpack.c.bf16 %v705, %v704
        %v713 = vpack.c.bf16 %v707, %v706
        %v714 = vpack.c.bf16 %v709, %v708
        %v715 = vpack.c.bf16 %v711, %v710
        %s716 = scalar_lea.vmem %s1, 128
        %v717 = vld [vmem:[%s716] sm:$0xf]
        %v718 = vld [vmem:[%s716 + $0x4] sm:$0xf]
        %v719 = vld [vmem:[%s716 + $0x8] sm:$0xf]
        %v720 = vld [vmem:[%s716 + $0xc] sm:$0xf]
        %v721 = vld [vmem:[%s716 + $0x10] sm:$0xf]
        %v722 = vld [vmem:[%s716 + $0x14] sm:$0xf]
        %v723 = vld [vmem:[%s716 + $0x18] sm:$0xf]
        %v724 = vld [vmem:[%s716 + $0x1c] sm:$0xf]
        %v733 = vunpack.c.l.b16 %v717
        %v734 = vunpack.c.l.b16 %v718
        %v735 = vunpack.c.l.b16 %v719
        %v736 = vunpack.c.l.b16 %v720
        %v737 = vunpack.c.l.b16 %v721
        %v738 = vunpack.c.l.b16 %v722
        %v739 = vunpack.c.l.b16 %v723
        %v740 = vunpack.c.l.b16 %v724
        %v741 = vpack.c.b16 %v734, %v733
        %v742 = vpack.c.b16 %v736, %v735
        %v743 = vpack.c.b16 %v738, %v737
        %v744 = vpack.c.b16 %v740, %v739
        %v750 = vsel %vm263, %v712, 0
        %v753 = vsel %vm263, %v713, 0
        %v756 = vsel %vm263, %v714, 0
        %v759 = vsel %vm263, %v715, 0
        %761 = vmatprep.subr.bf16.mxu0 0
        %762 = vmatpush1.bf16.msra.mxu0 %v741
        %763 = vmatprep.subr.bf16.mxu0 0
        %764 = vmatpush1.bf16.msra.mxu0 %v742
        %765 = vmatprep.subr.bf16.mxu0 0
        %766 = vmatpush1.bf16.msra.mxu0 %v743
        %767 = vmatprep.subr.bf16.mxu0 0
        %768 = vmatpush1.bf16.msra.mxu0 %v744
        %769 = vmatprep.subr.bf16.mxu0 0
        %770 = vmatpush1.bf16.msra.mxu0 0
        %771 = vmatprep.subr.bf16.mxu0 0
        %772 = vmatpush1.bf16.msra.mxu0 0
        %773 = vmatprep.subr.bf16.mxu0 0
        %774 = vmatpush1.bf16.msra.mxu0 0
        %775 = vmatprep.subr.bf16.mxu0 0
        %776 = vmatpush1.bf16.msra.mxu0 0
        %777 = vmatprep.subr.bf16.mxu0 0
        %778 = vmatpush1.bf16.msra.mxu0 0
        %779 = vmatprep.subr.bf16.mxu0 0
        %780 = vmatpush1.bf16.msra.mxu0 0
        %781 = vmatprep.subr.bf16.mxu0 0
        %782 = vmatpush1.bf16.msra.mxu0 0
        %783 = vmatprep.subr.bf16.mxu0 0
        %784 = vmatpush1.bf16.msra.mxu0 0
        %785 = vmatprep.subr.bf16.mxu0 0
        %786 = vmatpush1.bf16.msra.mxu0 0
        %787 = vmatprep.subr.bf16.mxu0 0
        %788 = vmatpush1.bf16.msra.mxu0 0
        %789 = vmatprep.subr.bf16.mxu0 0
        %790 = vmatpush1.bf16.msra.mxu0 0
        %791 = vmatprep.subr.bf16.mxu0 0
        %792 = vmatpush1.bf16.msra.mxu0 0
        %793 = vmatprep.mubr.bf16.mxu0 0
        %794 = vmatmul.mubr.bf16.gmra.mrb[0].mxu0 %v750
        %v795 = vpop.f32.mrb[0].mxu0
        %v796 = vadd.f32 0.0, %v795
        %v797 = vpop.f32.mrb[0].mxu0
        %v798 = vpop.f32.mrb[0].mxu0
        %v799 = vadd.f32 0.0, %v798
        %v800 = vpop.f32.mrb[0].mxu0
        %801 = vmatprep.mubr.bf16.mxu0 0
        %802 = vmatmul.mubr.bf16.gmra.mrb[0].mxu0 %v753
        %v803 = vpop.f32.mrb[0].mxu0
        %v804 = vadd.f32 0.0, %v803
        %v805 = vpop.f32.mrb[0].mxu0
        %v806 = vpop.f32.mrb[0].mxu0
        %v807 = vadd.f32 0.0, %v806
        %v808 = vpop.f32.mrb[0].mxu0
        %809 = vmatprep.mubr.bf16.mxu0 0
        %810 = vmatmul.mubr.bf16.gmra.mrb[0].mxu0 %v756
        %v811 = vpop.f32.mrb[0].mxu0
        %v812 = vadd.f32 0.0, %v811
        %v813 = vpop.f32.mrb[0].mxu0
        %v814 = vpop.f32.mrb[0].mxu0
        %v815 = vadd.f32 0.0, %v814
        %v816 = vpop.f32.mrb[0].mxu0
        %817 = vmatprep.mubr.bf16.mxu0 0
        %818 = vmatmul.mubr.bf16.gmra.mrb[0].mxu0 %v759
        %v819 = vpop.f32.mrb[0].mxu0
        %v820 = vadd.f32 0.0, %v819
        %v821 = vpop.f32.mrb[0].mxu0
        %v822 = vpop.f32.mrb[0].mxu0
        %v823 = vadd.f32 0.0, %v822
        %v824 = vpop.f32.mrb[0].mxu0
        %825 = vdwg.mxu0
        %v826 = vadd.f32 %v695, %v796
        %v827 = vadd.f32 %v696, %v799
        %v828 = vadd.f32 %v697, %v804
        %v829 = vadd.f32 %v698, %v807
        %v830 = vadd.f32 %v699, %v812
        %v831 = vadd.f32 %v700, %v815
        %v832 = vadd.f32 %v701, %v820
        %v833 = vadd.f32 %v702, %v823
        %v834 = vld [vmem:[%s572 + $0x1] sm:$0xff]
        %v835 = vld [vmem:[%s572 + $0x11] sm:$0xff]
        %v836 = vld [vmem:[%s572 + $0x21] sm:$0xff]
        %v837 = vld [vmem:[%s572 + $0x31] sm:$0xff]
        %v838 = vld [vmem:[%s572 + $0x41] sm:$0xff]
        %v839 = vld [vmem:[%s572 + $0x51] sm:$0xff]
        %v840 = vld [vmem:[%s572 + $0x61] sm:$0xff]
        %v841 = vld [vmem:[%s572 + $0x71] sm:$0xff]
        %v842 = vpack.c.bf16 %v835, %v834
        %v843 = vpack.c.bf16 %v837, %v836
        %v844 = vpack.c.bf16 %v839, %v838
        %v845 = vpack.c.bf16 %v841, %v840
        %s846 = scalar_lea.vmem %s1, 160
        %v847 = vld [vmem:[%s846] sm:$0xf]
        %v848 = vld [vmem:[%s846 + $0x4] sm:$0xf]
        %v849 = vld [vmem:[%s846 + $0x8] sm:$0xf]
        %v850 = vld [vmem:[%s846 + $0xc] sm:$0xf]
        %v851 = vld [vmem:[%s846 + $0x10] sm:$0xf]
        %v852 = vld [vmem:[%s846 + $0x14] sm:$0xf]
        %v853 = vld [vmem:[%s846 + $0x18] sm:$0xf]
        %v854 = vld [vmem:[%s846 + $0x1c] sm:$0xf]
        %v863 = vunpack.c.l.b16 %v847
        %v864 = vunpack.c.l.b16 %v848
        %v865 = vunpack.c.l.b16 %v849
        %v866 = vunpack.c.l.b16 %v850
        %v867 = vunpack.c.l.b16 %v851
        %v868 = vunpack.c.l.b16 %v852
        %v869 = vunpack.c.l.b16 %v853
        %v870 = vunpack.c.l.b16 %v854
        %v871 = vpack.c.b16 %v864, %v863
        %v872 = vpack.c.b16 %v866, %v865
        %v873 = vpack.c.b16 %v868, %v867
        %v874 = vpack.c.b16 %v870, %v869
        %v880 = vsel %vm263, %v842, 0
        %v883 = vsel %vm263, %v843, 0
        %v886 = vsel %vm263, %v844, 0
        %v889 = vsel %vm263, %v845, 0
        %891 = vmatprep.subr.bf16.mxu0 0
        %892 = vmatpush1.bf16.msra.mxu0 %v871
        %893 = vmatprep.subr.bf16.mxu0 0
        %894 = vmatpush1.bf16.msra.mxu0 %v872
        %895 = vmatprep.subr.bf16.mxu0 0
        %896 = vmatpush1.bf16.msra.mxu0 %v873
        %897 = vmatprep.subr.bf16.mxu0 0
        %898 = vmatpush1.bf16.msra.mxu0 %v874
        %899 = vmatprep.subr.bf16.mxu0 0
        %900 = vmatpush1.bf16.msra.mxu0 0
        %901 = vmatprep.subr.bf16.mxu0 0
        %902 = vmatpush1.bf16.msra.mxu0 0
        %903 = vmatprep.subr.bf16.mxu0 0
        %904 = vmatpush1.bf16.msra.mxu0 0
        %905 = vmatprep.subr.bf16.mxu0 0
        %906 = vmatpush1.bf16.msra.mxu0 0
        %907 = vmatprep.subr.bf16.mxu0 0
        %908 = vmatpush1.bf16.msra.mxu0 0
        %909 = vmatprep.subr.bf16.mxu0 0
        %910 = vmatpush1.bf16.msra.mxu0 0
        %911 = vmatprep.subr.bf16.mxu0 0
        %912 = vmatpush1.bf16.msra.mxu0 0
        %913 = vmatprep.subr.bf16.mxu0 0
        %914 = vmatpush1.bf16.msra.mxu0 0
        %915 = vmatprep.subr.bf16.mxu0 0
        %916 = vmatpush1.bf16.msra.mxu0 0
        %917 = vmatprep.subr.bf16.mxu0 0
        %918 = vmatpush1.bf16.msra.mxu0 0
        %919 = vmatprep.subr.bf16.mxu0 0
        %920 = vmatpush1.bf16.msra.mxu0 0
        %921 = vmatprep.subr.bf16.mxu0 0
        %922 = vmatpush1.bf16.msra.mxu0 0
        %923 = vmatprep.mubr.bf16.mxu0 0
        %924 = vmatmul.mubr.bf16.gmra.mrb[0].mxu0 %v880
        %v925 = vpop.f32.mrb[0].mxu0
        %v926 = vadd.f32 0.0, %v925
        %v927 = vpop.f32.mrb[0].mxu0
        %v928 = vpop.f32.mrb[0].mxu0
        %v929 = vadd.f32 0.0, %v928
        %v930 = vpop.f32.mrb[0].mxu0
        %931 = vmatprep.mubr.bf16.mxu0 0
        %932 = vmatmul.mubr.bf16.gmra.mrb[0].mxu0 %v883
        %v933 = vpop.f32.mrb[0].mxu0
        %v934 = vadd.f32 0.0, %v933
        %v935 = vpop.f32.mrb[0].mxu0
        %v936 = vpop.f32.mrb[0].mxu0
        %v937 = vadd.f32 0.0, %v936
        %v938 = vpop.f32.mrb[0].mxu0
        %939 = vmatprep.mubr.bf16.mxu0 0
        %940 = vmatmul.mubr.bf16.gmra.mrb[0].mxu0 %v886
        %v941 = vpop.f32.mrb[0].mxu0
        %v942 = vadd.f32 0.0, %v941
        %v943 = vpop.f32.mrb[0].mxu0
        %v944 = vpop.f32.mrb[0].mxu0
        %v945 = vadd.f32 0.0, %v944
        %v946 = vpop.f32.mrb[0].mxu0
        %947 = vmatprep.mubr.bf16.mxu0 0
        %948 = vmatmul.mubr.bf16.gmra.mrb[0].mxu0 %v889
        %v949 = vpop.f32.mrb[0].mxu0
        %v950 = vadd.f32 0.0, %v949
        %v951 = vpop.f32.mrb[0].mxu0
        %v952 = vpop.f32.mrb[0].mxu0
        %v953 = vadd.f32 0.0, %v952
        %v954 = vpop.f32.mrb[0].mxu0
        %955 = vdwg.mxu0
        %v956 = vadd.f32 %v826, %v926
        %v957 = vadd.f32 %v827, %v929
        %v958 = vadd.f32 %v828, %v934
        %v959 = vadd.f32 %v829, %v937
        %v960 = vadd.f32 %v830, %v942
        %v961 = vadd.f32 %v831, %v945
        %v962 = vadd.f32 %v832, %v950
        %v963 = vadd.f32 %v833, %v953
        %s964 = scalar_lea.vmem %s195, 16
        %v965 = vld [vmem:[%s964] sm:$0xff]
        %v966 = vld [vmem:[%s964 + $0x10] sm:$0xff]
        %v967 = vld [vmem:[%s964 + $0x20] sm:$0xff]
        %v968 = vld [vmem:[%s964 + $0x30] sm:$0xff]
        %v969 = vld [vmem:[%s964 + $0x40] sm:$0xff]
        %v970 = vld [vmem:[%s964 + $0x50] sm:$0xff]
        %v971 = vld [vmem:[%s964 + $0x60] sm:$0xff]
        %v972 = vld [vmem:[%s964 + $0x70] sm:$0xff]
        %v973 = vpack.c.bf16 %v966, %v965
        %v974 = vpack.c.bf16 %v968, %v967
        %v975 = vpack.c.bf16 %v970, %v969
        %v976 = vpack.c.bf16 %v972, %v971
        %s977 = scalar_lea.vmem %s1, 192
        %v978 = vld [vmem:[%s977] sm:$0xf]
        %v979 = vld [vmem:[%s977 + $0x4] sm:$0xf]
        %v980 = vld [vmem:[%s977 + $0x8] sm:$0xf]
        %v981 = vld [vmem:[%s977 + $0xc] sm:$0xf]
        %v982 = vld [vmem:[%s977 + $0x10] sm:$0xf]
        %v983 = vld [vmem:[%s977 + $0x14] sm:$0xf]
        %v984 = vld [vmem:[%s977 + $0x18] sm:$0xf]
        %v985 = vld [vmem:[%s977 + $0x1c] sm:$0xf]
        %v994 = vunpack.c.l.b16 %v978
        %v995 = vunpack.c.l.b16 %v979
        %v996 = vunpack.c.l.b16 %v980
        %v997 = vunpack.c.l.b16 %v981
        %v998 = vunpack.c.l.b16 %v982
        %v999 = vunpack.c.l.b16 %v983
        %v1000 = vunpack.c.l.b16 %v984
        %v1001 = vunpack.c.l.b16 %v985
        %v1002 = vpack.c.b16 %v995, %v994
        %v1003 = vpack.c.b16 %v997, %v996
        %v1004 = vpack.c.b16 %v999, %v998
        %v1005 = vpack.c.b16 %v1001, %v1000
        %v1011 = vsel %vm263, %v973, 0
        %v1014 = vsel %vm263, %v974, 0
        %v1017 = vsel %vm263, %v975, 0
        %v1020 = vsel %vm263, %v976, 0
        %1022 = vmatprep.subr.bf16.mxu0 0
        %1023 = vmatpush1.bf16.msra.mxu0 %v1002
        %1024 = vmatprep.subr.bf16.mxu0 0
        %1025 = vmatpush1.bf16.msra.mxu0 %v1003
        %1026 = vmatprep.subr.bf16.mxu0 0
        %1027 = vmatpush1.bf16.msra.mxu0 %v1004
        %1028 = vmatprep.subr.bf16.mxu0 0
        %1029 = vmatpush1.bf16.msra.mxu0 %v1005
        %1030 = vmatprep.subr.bf16.mxu0 0
        %1031 = vmatpush1.bf16.msra.mxu0 0
        %1032 = vmatprep.subr.bf16.mxu0 0
        %1033 = vmatpush1.bf16.msra.mxu0 0
        %1034 = vmatprep.subr.bf16.mxu0 0
        %1035 = vmatpush1.bf16.msra.mxu0 0
        %1036 = vmatprep.subr.bf16.mxu0 0
        %1037 = vmatpush1.bf16.msra.mxu0 0
        %1038 = vmatprep.subr.bf16.mxu0 0
        %1039 = vmatpush1.bf16.msra.mxu0 0
        %1040 = vmatprep.subr.bf16.mxu0 0
        %1041 = vmatpush1.bf16.msra.mxu0 0
        %1042 = vmatprep.subr.bf16.mxu0 0
        %1043 = vmatpush1.bf16.msra.mxu0 0
        %1044 = vmatprep.subr.bf16.mxu0 0
        %1045 = vmatpush1.bf16.msra.mxu0 0
        %1046 = vmatprep.subr.bf16.mxu0 0
        %1047 = vmatpush1.bf16.msra.mxu0 0
        %1048 = vmatprep.subr.bf16.mxu0 0
        %1049 = vmatpush1.bf16.msra.mxu0 0
        %1050 = vmatprep.subr.bf16.mxu0 0
        %1051 = vmatpush1.bf16.msra.mxu0 0
        %1052 = vmatprep.subr.bf16.mxu0 0
        %1053 = vmatpush1.bf16.msra.mxu0 0
        %1054 = vmatprep.mubr.bf16.mxu0 0
        %1055 = vmatmul.mubr.bf16.gmra.mrb[0].mxu0 %v1011
        %v1056 = vpop.f32.mrb[0].mxu0
        %v1057 = vadd.f32 0.0, %v1056
        %v1058 = vpop.f32.mrb[0].mxu0
        %v1059 = vpop.f32.mrb[0].mxu0
        %v1060 = vadd.f32 0.0, %v1059
        %v1061 = vpop.f32.mrb[0].mxu0
        %1062 = vmatprep.mubr.bf16.mxu0 0
        %1063 = vmatmul.mubr.bf16.gmra.mrb[0].mxu0 %v1014
        %v1064 = vpop.f32.mrb[0].mxu0
        %v1065 = vadd.f32 0.0, %v1064
        %v1066 = vpop.f32.mrb[0].mxu0
        %v1067 = vpop.f32.mrb[0].mxu0
        %v1068 = vadd.f32 0.0, %v1067
        %v1069 = vpop.f32.mrb[0].mxu0
        %1070 = vmatprep.mubr.bf16.mxu0 0
        %1071 = vmatmul.mubr.bf16.gmra.mrb[0].mxu0 %v1017
        %v1072 = vpop.f32.mrb[0].mxu0
        %v1073 = vadd.f32 0.0, %v1072
        %v1074 = vpop.f32.mrb[0].mxu0
        %v1075 = vpop.f32.mrb[0].mxu0
        %v1076 = vadd.f32 0.0, %v1075
        %v1077 = vpop.f32.mrb[0].mxu0
        %1078 = vmatprep.mubr.bf16.mxu0 0
        %1079 = vmatmul.mubr.bf16.gmra.mrb[0].mxu0 %v1020
        %v1080 = vpop.f32.mrb[0].mxu0
        %v1081 = vadd.f32 0.0, %v1080
        %v1082 = vpop.f32.mrb[0].mxu0
        %v1083 = vpop.f32.mrb[0].mxu0
        %v1084 = vadd.f32 0.0, %v1083
        %v1085 = vpop.f32.mrb[0].mxu0
        %1086 = vdwg.mxu0
        %v1087 = vadd.f32 %v956, %v1057
        %v1088 = vadd.f32 %v957, %v1060
        %v1089 = vadd.f32 %v958, %v1065
        %v1090 = vadd.f32 %v959, %v1068
        %v1091 = vadd.f32 %v960, %v1073
        %v1092 = vadd.f32 %v961, %v1076
        %v1093 = vadd.f32 %v962, %v1081
        %v1094 = vadd.f32 %v963, %v1084
        %s1095 = scalar_lea.vmem %s195, 160
        %v1096 = vld [vmem:[%s1095] sm:$0xff]
        %v1097 = vld [vmem:[%s1095 + $0x10] sm:$0xff]
        %v1098 = vld [vmem:[%s1095 + $0x20] sm:$0xff]
        %v1099 = vld [vmem:[%s1095 + $0x30] sm:$0xff]
        %v1100 = vld [vmem:[%s1095 + $0x40] sm:$0xff]
        %v1101 = vld [vmem:[%s1095 + $0x50] sm:$0xff]
        %v1102 = vld [vmem:[%s1095 + $0x60] sm:$0xff]
        %v1103 = vld [vmem:[%s1095 + $0x70] sm:$0xff]
        %v1104 = vpack.c.bf16 %v1097, %v1096
        %v1105 = vpack.c.bf16 %v1099, %v1098
        %v1106 = vpack.c.bf16 %v1101, %v1100
        %v1107 = vpack.c.bf16 %v1103, %v1102
        %s1108 = scalar_lea.vmem %s1, 224
        %v1109 = vld [vmem:[%s1108] sm:$0xf]
        %v1110 = vld [vmem:[%s1108 + $0x4] sm:$0xf]
        %v1111 = vld [vmem:[%s1108 + $0x8] sm:$0xf]
        %v1112 = vld [vmem:[%s1108 + $0xc] sm:$0xf]
        %v1113 = vld [vmem:[%s1108 + $0x10] sm:$0xf]
        %v1114 = vld [vmem:[%s1108 + $0x14] sm:$0xf]
        %v1115 = vld [vmem:[%s1108 + $0x18] sm:$0xf]
        %v1116 = vld [vmem:[%s1108 + $0x1c] sm:$0xf]
        %v1125 = vunpack.c.l.b16 %v1109
        %v1126 = vunpack.c.l.b16 %v1110
        %v1127 = vunpack.c.l.b16 %v1111
        %v1128 = vunpack.c.l.b16 %v1112
        %v1129 = vunpack.c.l.b16 %v1113
        %v1130 = vunpack.c.l.b16 %v1114
        %v1131 = vunpack.c.l.b16 %v1115
        %v1132 = vunpack.c.l.b16 %v1116
        %v1133 = vpack.c.b16 %v1126, %v1125
        %v1134 = vpack.c.b16 %v1128, %v1127
        %v1135 = vpack.c.b16 %v1130, %v1129
        %v1136 = vpack.c.b16 %v1132, %v1131
        %v1142 = vsel %vm263, %v1104, 0
        %v1145 = vsel %vm263, %v1105, 0
        %v1148 = vsel %vm263, %v1106, 0
        %v1151 = vsel %vm263, %v1107, 0
        %1153 = vmatprep.subr.bf16.mxu0 0
        %1154 = vmatpush1.bf16.msra.mxu0 %v1133
        %1155 = vmatprep.subr.bf16.mxu0 0
        %1156 = vmatpush1.bf16.msra.mxu0 %v1134
        %1157 = vmatprep.subr.bf16.mxu0 0
        %1158 = vmatpush1.bf16.msra.mxu0 %v1135
        %1159 = vmatprep.subr.bf16.mxu0 0
        %1160 = vmatpush1.bf16.msra.mxu0 %v1136
        %1161 = vmatprep.subr.bf16.mxu0 0
        %1162 = vmatpush1.bf16.msra.mxu0 0
        %1163 = vmatprep.subr.bf16.mxu0 0
        %1164 = vmatpush1.bf16.msra.mxu0 0
        %1165 = vmatprep.subr.bf16.mxu0 0
        %1166 = vmatpush1.bf16.msra.mxu0 0
        %1167 = vmatprep.subr.bf16.mxu0 0
        %1168 = vmatpush1.bf16.msra.mxu0 0
        %1169 = vmatprep.subr.bf16.mxu0 0
        %1170 = vmatpush1.bf16.msra.mxu0 0
        %1171 = vmatprep.subr.bf16.mxu0 0
        %1172 = vmatpush1.bf16.msra.mxu0 0
        %1173 = vmatprep.subr.bf16.mxu0 0
        %1174 = vmatpush1.bf16.msra.mxu0 0
        %1175 = vmatprep.subr.bf16.mxu0 0
        %1176 = vmatpush1.bf16.msra.mxu0 0
        %1177 = vmatprep.subr.bf16.mxu0 0
        %1178 = vmatpush1.bf16.msra.mxu0 0
        %1179 = vmatprep.subr.bf16.mxu0 0
        %1180 = vmatpush1.bf16.msra.mxu0 0
        %1181 = vmatprep.subr.bf16.mxu0 0
        %1182 = vmatpush1.bf16.msra.mxu0 0
        %1183 = vmatprep.subr.bf16.mxu0 0
        %1184 = vmatpush1.bf16.msra.mxu0 0
        %1185 = vmatprep.mubr.bf16.mxu0 0
        %1186 = vmatmul.mubr.bf16.gmra.mrb[0].mxu0 %v1142
        %v1187 = vpop.f32.mrb[0].mxu0
        %v1188 = vadd.f32 0.0, %v1187
        %v1189 = vpop.f32.mrb[0].mxu0
        %v1190 = vpop.f32.mrb[0].mxu0
        %v1191 = vadd.f32 0.0, %v1190
        %v1192 = vpop.f32.mrb[0].mxu0
        %1193 = vmatprep.mubr.bf16.mxu0 0
        %1194 = vmatmul.mubr.bf16.gmra.mrb[0].mxu0 %v1145
        %v1195 = vpop.f32.mrb[0].mxu0
        %v1196 = vadd.f32 0.0, %v1195
        %v1197 = vpop.f32.mrb[0].mxu0
        %v1198 = vpop.f32.mrb[0].mxu0
        %v1199 = vadd.f32 0.0, %v1198
        %v1200 = vpop.f32.mrb[0].mxu0
        %1201 = vmatprep.mubr.bf16.mxu0 0
        %1202 = vmatmul.mubr.bf16.gmra.mrb[0].mxu0 %v1148
        %v1203 = vpop.f32.mrb[0].mxu0
        %v1204 = vadd.f32 0.0, %v1203
        %v1205 = vpop.f32.mrb[0].mxu0
        %v1206 = vpop.f32.mrb[0].mxu0
        %v1207 = vadd.f32 0.0, %v1206
        %v1208 = vpop.f32.mrb[0].mxu0
        %1209 = vmatprep.mubr.bf16.mxu0 0
        %1210 = vmatmul.mubr.bf16.gmra.mrb[0].mxu0 %v1151
        %v1211 = vpop.f32.mrb[0].mxu0
        %v1212 = vadd.f32 0.0, %v1211
        %v1213 = vpop.f32.mrb[0].mxu0
        %v1214 = vpop.f32.mrb[0].mxu0
        %v1215 = vadd.f32 0.0, %v1214
        %v1216 = vpop.f32.mrb[0].mxu0
        %1217 = vdwg.mxu0
        %v1218 = vadd.f32 %v1087, %v1188
        %v1219 = vadd.f32 %v1088, %v1191
        %v1220 = vadd.f32 %v1089, %v1196
        %v1221 = vadd.f32 %v1090, %v1199
        %v1222 = vadd.f32 %v1091, %v1204
        %v1223 = vadd.f32 %v1092, %v1207
        %v1224 = vadd.f32 %v1093, %v1212
        %v1225 = vadd.f32 %v1094, %v1215
        %v1226 = vld [vmem:[%s964 + $0x1] sm:$0xff]
        %v1227 = vld [vmem:[%s964 + $0x11] sm:$0xff]
        %v1228 = vld [vmem:[%s964 + $0x21] sm:$0xff]
        %v1229 = vld [vmem:[%s964 + $0x31] sm:$0xff]
        %v1230 = vld [vmem:[%s964 + $0x41] sm:$0xff]
        %v1231 = vld [vmem:[%s964 + $0x51] sm:$0xff]
        %v1232 = vld [vmem:[%s964 + $0x61] sm:$0xff]
        %v1233 = vld [vmem:[%s964 + $0x71] sm:$0xff]
        %v1234 = vpack.c.bf16 %v1227, %v1226
        %v1235 = vpack.c.bf16 %v1229, %v1228
        %v1236 = vpack.c.bf16 %v1231, %v1230
        %v1237 = vpack.c.bf16 %v1233, %v1232
        %s1238 = scalar_lea.vmem %s1, 256
        %v1239 = vld [vmem:[%s1238] sm:$0xf]
        %v1240 = vld [vmem:[%s1238 + $0x4] sm:$0xf]
        %v1241 = vld [vmem:[%s1238 + $0x8] sm:$0xf]
        %v1242 = vld [vmem:[%s1238 + $0xc] sm:$0xf]
        %v1243 = vld [vmem:[%s1238 + $0x10] sm:$0xf]
        %v1244 = vld [vmem:[%s1238 + $0x14] sm:$0xf]
        %v1245 = vld [vmem:[%s1238 + $0x18] sm:$0xf]
        %v1246 = vld [vmem:[%s1238 + $0x1c] sm:$0xf]
        %v1255 = vunpack.c.l.b16 %v1239
        %v1256 = vunpack.c.l.b16 %v1240
        %v1257 = vunpack.c.l.b16 %v1241
        %v1258 = vunpack.c.l.b16 %v1242
        %v1259 = vunpack.c.l.b16 %v1243
        %v1260 = vunpack.c.l.b16 %v1244
        %v1261 = vunpack.c.l.b16 %v1245
        %v1262 = vunpack.c.l.b16 %v1246
        %v1263 = vpack.c.b16 %v1256, %v1255
        %v1264 = vpack.c.b16 %v1258, %v1257
        %v1265 = vpack.c.b16 %v1260, %v1259
        %v1266 = vpack.c.b16 %v1262, %v1261
        %v1272 = vsel %vm263, %v1234, 0
        %v1275 = vsel %vm263, %v1235, 0
        %v1278 = vsel %vm263, %v1236, 0
        %v1281 = vsel %vm263, %v1237, 0
        %1283 = vmatprep.subr.bf16.mxu0 0
        %1284 = vmatpush1.bf16.msra.mxu0 %v1263
        %1285 = vmatprep.subr.bf16.mxu0 0
        %1286 = vmatpush1.bf16.msra.mxu0 %v1264
        %1287 = vmatprep.subr.bf16.mxu0 0
        %1288 = vmatpush1.bf16.msra.mxu0 %v1265
        %1289 = vmatprep.subr.bf16.mxu0 0
        %1290 = vmatpush1.bf16.msra.mxu0 %v1266
        %1291 = vmatprep.subr.bf16.mxu0 0
        %1292 = vmatpush1.bf16.msra.mxu0 0
        %1293 = vmatprep.subr.bf16.mxu0 0
        %1294 = vmatpush1.bf16.msra.mxu0 0
        %1295 = vmatprep.subr.bf16.mxu0 0
        %1296 = vmatpush1.bf16.msra.mxu0 0
        %1297 = vmatprep.subr.bf16.mxu0 0
        %1298 = vmatpush1.bf16.msra.mxu0 0
        %1299 = vmatprep.subr.bf16.mxu0 0
        %1300 = vmatpush1.bf16.msra.mxu0 0
        %1301 = vmatprep.subr.bf16.mxu0 0
        %1302 = vmatpush1.bf16.msra.mxu0 0
        %1303 = vmatprep.subr.bf16.mxu0 0
        %1304 = vmatpush1.bf16.msra.mxu0 0
        %1305 = vmatprep.subr.bf16.mxu0 0
        %1306 = vmatpush1.bf16.msra.mxu0 0
        %1307 = vmatprep.subr.bf16.mxu0 0
        %1308 = vmatpush1.bf16.msra.mxu0 0
        %1309 = vmatprep.subr.bf16.mxu0 0
        %1310 = vmatpush1.bf16.msra.mxu0 0
        %1311 = vmatprep.subr.bf16.mxu0 0
        %1312 = vmatpush1.bf16.msra.mxu0 0
        %1313 = vmatprep.subr.bf16.mxu0 0
        %1314 = vmatpush1.bf16.msra.mxu0 0
        %1315 = vmatprep.mubr.bf16.mxu0 0
        %1316 = vmatmul.mubr.bf16.gmra.mrb[0].mxu0 %v1272
        %v1317 = vpop.f32.mrb[0].mxu0
        %v1318 = vadd.f32 0.0, %v1317
        %v1319 = vpop.f32.mrb[0].mxu0
        %v1320 = vpop.f32.mrb[0].mxu0
        %v1321 = vadd.f32 0.0, %v1320
        %v1322 = vpop.f32.mrb[0].mxu0
        %1323 = vmatprep.mubr.bf16.mxu0 0
        %1324 = vmatmul.mubr.bf16.gmra.mrb[0].mxu0 %v1275
        %v1325 = vpop.f32.mrb[0].mxu0
        %v1326 = vadd.f32 0.0, %v1325
        %v1327 = vpop.f32.mrb[0].mxu0
        %v1328 = vpop.f32.mrb[0].mxu0
        %v1329 = vadd.f32 0.0, %v1328
        %v1330 = vpop.f32.mrb[0].mxu0
        %1331 = vmatprep.mubr.bf16.mxu0 0
        %1332 = vmatmul.mubr.bf16.gmra.mrb[0].mxu0 %v1278
        %v1333 = vpop.f32.mrb[0].mxu0
        %v1334 = vadd.f32 0.0, %v1333
        %v1335 = vpop.f32.mrb[0].mxu0
        %v1336 = vpop.f32.mrb[0].mxu0
        %v1337 = vadd.f32 0.0, %v1336
        %v1338 = vpop.f32.mrb[0].mxu0
        %1339 = vmatprep.mubr.bf16.mxu0 0
        %1340 = vmatmul.mubr.bf16.gmra.mrb[0].mxu0 %v1281
        %v1341 = vpop.f32.mrb[0].mxu0
        %v1342 = vadd.f32 0.0, %v1341
        %v1343 = vpop.f32.mrb[0].mxu0
        %v1344 = vpop.f32.mrb[0].mxu0
        %v1345 = vadd.f32 0.0, %v1344
        %v1346 = vpop.f32.mrb[0].mxu0
        %1347 = vdwg.mxu0
        %v1348 = vadd.f32 %v1218, %v1318
        %v1349 = vadd.f32 %v1219, %v1321
        %v1350 = vadd.f32 %v1220, %v1326
        %v1351 = vadd.f32 %v1221, %v1329
        %v1352 = vadd.f32 %v1222, %v1334
        %v1353 = vadd.f32 %v1223, %v1337
        %v1354 = vadd.f32 %v1224, %v1342
        %v1355 = vadd.f32 %v1225, %v1345
        %1356 = vadd.xlane.f32.xlu0 %v1348
        %v1357 = vpop.xlane.xlu0 %1356
        %1358 = vadd.xlane.f32.xlu0 %v1349
        %v1359 = vpop.xlane.xlu0 %1358
        %1360 = vadd.xlane.f32.xlu0 %v1350
        %v1361 = vpop.xlane.xlu0 %1360
        %1362 = vadd.xlane.f32.xlu0 %v1351
        %v1363 = vpop.xlane.xlu0 %1362
        %1364 = vadd.xlane.f32.xlu0 %v1352
        %v1365 = vpop.xlane.xlu0 %1364
        %1366 = vadd.xlane.f32.xlu0 %v1353
        %v1367 = vpop.xlane.xlu0 %1366
        %1368 = vadd.xlane.f32.xlu0 %v1354
        %v1369 = vpop.xlane.xlu0 %1368
        %1370 = vadd.xlane.f32.xlu0 %v1355
        %v1371 = vpop.xlane.xlu0 %1370
        %v1372 = vrcp.pop 128.0
        %v1373 = vmul.f32 %v1357, %v1372
        %v1374 = vmul.f32 %v1359, %v1372
        %v1375 = vmul.f32 %v1361, %v1372
        %v1376 = vmul.f32 %v1363, %v1372
        %v1377 = vmul.f32 %v1365, %v1372
        %v1378 = vmul.f32 %v1367, %v1372
        %v1379 = vmul.f32 %v1369, %v1372
        %v1380 = vmul.f32 %v1371, %v1372
        %v1381 = vsub.f32 %v1348, %v1373
        %v1382 = vsub.f32 %v1349, %v1374
        %v1383 = vsub.f32 %v1350, %v1375
        %v1384 = vsub.f32 %v1351, %v1376
        %v1385 = vsub.f32 %v1352, %v1377
        %v1386 = vsub.f32 %v1353, %v1378
        %v1387 = vsub.f32 %v1354, %v1379
        %v1388 = vsub.f32 %v1355, %v1380
        %v1389 = vmul.f32 %v1381, %v1381
        %v1390 = vmul.f32 %v1382, %v1382
        %v1391 = vmul.f32 %v1383, %v1383
        %v1392 = vmul.f32 %v1384, %v1384
        %v1393 = vmul.f32 %v1385, %v1385
        %v1394 = vmul.f32 %v1386, %v1386
        %v1395 = vmul.f32 %v1387, %v1387
        %v1396 = vmul.f32 %v1388, %v1388
        %1397 = vadd.xlane.f32.xlu0 %v1389
        %v1398 = vpop.xlane.xlu0 %1397
        %1399 = vadd.xlane.f32.xlu0 %v1390
        %v1400 = vpop.xlane.xlu0 %1399
        %1401 = vadd.xlane.f32.xlu0 %v1391
        %v1402 = vpop.xlane.xlu0 %1401
        %1403 = vadd.xlane.f32.xlu0 %v1392
        %v1404 = vpop.xlane.xlu0 %1403
        %1405 = vadd.xlane.f32.xlu0 %v1393
        %v1406 = vpop.xlane.xlu0 %1405
        %1407 = vadd.xlane.f32.xlu0 %v1394
        %v1408 = vpop.xlane.xlu0 %1407
        %1409 = vadd.xlane.f32.xlu0 %v1395
        %v1410 = vpop.xlane.xlu0 %1409
        %1411 = vadd.xlane.f32.xlu0 %v1396
        %v1412 = vpop.xlane.xlu0 %1411
        %v1413 = vmul.f32 %v1398, %v1372
        %v1414 = vmul.f32 %v1400, %v1372
        %v1415 = vmul.f32 %v1402, %v1372
        %v1416 = vmul.f32 %v1404, %v1372
        %v1417 = vmul.f32 %v1406, %v1372
        %v1418 = vmul.f32 %v1408, %v1372
        %v1419 = vmul.f32 %v1410, %v1372
        %v1420 = vmul.f32 %v1412, %v1372
        %v1421 = vadd.f32 %v1413, 1e-05
        %v1422 = vadd.f32 %v1414, 1e-05
        %v1423 = vadd.f32 %v1415, 1e-05
        %v1424 = vadd.f32 %v1416, 1e-05
        %v1425 = vadd.f32 %v1417, 1e-05
        %v1426 = vadd.f32 %v1418, 1e-05
        %v1427 = vadd.f32 %v1419, 1e-05
        %v1428 = vadd.f32 %v1420, 1e-05
        %v1429 = vrsqrt.pop %v1421
        %v1430 = vrsqrt.pop %v1422
        %v1431 = vrsqrt.pop %v1423
        %v1432 = vrsqrt.pop %v1424
        %v1433 = vrsqrt.pop %v1425
        %v1434 = vrsqrt.pop %v1426
        %v1435 = vrsqrt.pop %v1427
        %v1436 = vrsqrt.pop %v1428
        %v1437 = vmul.f32 %v1381, %v1429
        %v1438 = vmul.f32 %v1382, %v1430
        %v1439 = vmul.f32 %v1383, %v1431
        %v1440 = vmul.f32 %v1384, %v1432
        %v1441 = vmul.f32 %v1385, %v1433
        %v1442 = vmul.f32 %v1386, %v1434
        %v1443 = vmul.f32 %v1387, %v1435
        %v1444 = vmul.f32 %v1388, %v1436
        %v1445 = vld [vmem:[%s2] sm:$0x1]
        %v1447 = vlaneseq
        %v1448 = vshrl.u32 %v1447, 7
        %v1449 = vsub.s32 0, %v1448
        %v1450 = vrot.slane %v1445, %v1449
        %v1452 = vmul.f32 %v1437, %v1450
        %v1453 = vmul.f32 %v1438, %v1450
        %v1454 = vmul.f32 %v1439, %v1450
        %v1455 = vmul.f32 %v1440, %v1450
        %v1456 = vmul.f32 %v1441, %v1450
        %v1457 = vmul.f32 %v1442, %v1450
        %v1458 = vmul.f32 %v1443, %v1450
        %v1459 = vmul.f32 %v1444, %v1450
        %v1460 = vld [vmem:[%s3] sm:$0x1]
        %v1462 = vlaneseq
        %v1463 = vshrl.u32 %v1462, 7
        %v1464 = vsub.s32 0, %v1463
        %v1465 = vrot.slane %v1460, %v1464
        %v1467 = vadd.f32 %v1452, %v1465
        %v1468 = vadd.f32 %v1453, %v1465
        %v1469 = vadd.f32 %v1454, %v1465
        %v1470 = vadd.f32 %v1455, %v1465
        %v1471 = vadd.f32 %v1456, %v1465
        %v1472 = vadd.f32 %v1457, %v1465
        %v1473 = vadd.f32 %v1458, %v1465
        %v1474 = vadd.f32 %v1459, %v1465
        %1475 = vst [vmem:[%s190] sm:$0xff] %v1467
        %1476 = vst [vmem:[%s190 + $0x8] sm:$0xff] %v1468
        %1477 = vst [vmem:[%s190 + $0x10] sm:$0xff] %v1469
        %1478 = vst [vmem:[%s190 + $0x18] sm:$0xff] %v1470
        %1479 = vst [vmem:[%s190 + $0x20] sm:$0xff] %v1471
        %1480 = vst [vmem:[%s190 + $0x28] sm:$0xff] %v1472
        %1481 = vst [vmem:[%s190 + $0x30] sm:$0xff] %v1473
        %1482 = vst [vmem:[%s190 + $0x38] sm:$0xff] %v1474
        %s1483 = sand.u32 %s115, 1
        %s1484 = scalar_lea.sflag [#allocation3], %s1483
        %s1485 = sand.u32 %s115, 1
        %s1486 = smul.addr %s1485, 64
        %s1487 = scalar_lea.vmem [#allocation2], %s1486
        // Predicated region
        $region37: #{tpu_custom_call.1} parent=35 // pred_check
          %p1488 = pneg %p125
        $region38: #{tpu_custom_call.1} parent=35 // pred_check_branch
          %1490 = sbr.rel (%p1488) target = $region40
        $region39: #{tpu_custom_call.1} parent=35 // pred_region
          %s1492 = ssub.s32 1024, 1024
          %1493 = vsyncadd %s1484, %s1492
          %s1494 = smul.addr %s18, 8
          %s1495 = smul.addr %s1494, 128
          %s1496 = scalar_lea.hbm %s4, %s1495
          %s1497 = sshll.u32 %s1487, 4
          %s1498 = int_to_ptr.vmem [resolvable:$true] %s1497
          %1503 = dma.vmem_to_hbm [thread:$0]  %s1498, 1024, %s1496, %s1484, 128, 128, 8
        $region40: #{tpu_custom_call.1} parent=35 // pred_fallthru
          _
      $region36: #{tpu_custom_call.1} parent=5 // pred_fallthru
        _
      %p1504 = scmp.le.s32.totalorder 2, %s13
      // Predicated region
      $region41: #{tpu_custom_call.1} parent=5 // pred_check
        %p1505 = pneg %p1504
      $region42: #{tpu_custom_call.1} parent=5 // pred_check_branch
        %1507 = sbr.rel (%p1505) target = $region44
      $region43: #{tpu_custom_call.1} parent=5 // pred_region
        %s1508 = ssub.s32 %s13, 2
        // Predicated region
        $region45: #{tpu_custom_call.1} parent=43 // pred_check
          %p1509 = pneg %p131
        $region46: #{tpu_custom_call.1} parent=43 // pred_check_branch
          %1511 = sbr.rel (%p1509) target = $region48
        $region47: #{tpu_custom_call.1} parent=43 // pred_region
          %s1512 = sand.u32 %s116, 1
          %s1513 = scalar_lea.sflag [#allocation3], %s1512
          %s1514 = sand.u32 %s116, 1
          %s1515 = smul.addr %s1514, 64
          %s1516 = scalar_lea.vmem [#allocation2], %s1515
          %1517 = dma.done %s1513, 1024
        $region48: #{tpu_custom_call.1} parent=43 // pred_fallthru
          _
      $region44: #{tpu_custom_call.1} parent=5 // pred_fallthru
        _
    $region6: #{tpu_custom_call.1} parent=1 // loop_footer
      %s17 = sadd.s32 1, %s13
    $region7: #{tpu_custom_call.1} parent=1 // loop_footer_branch
      %12 = sbr.rel target = $region3
    $region8: #{tpu_custom_call.1} parent=1 // loop_exit
      _
    %1518 = vsyncpa [#allocation3], 1
    %s1519 = scalar_lea.sflag [#allocation3], 1
    %1520 = vsyncpa %s1519, 1

</llo_original>
